<compile_context>
chip_gen: v7x
topology: tpu7x:2x2x1
jax: 0.10.0
libtpu: 0.0.40
codegen_flags: <defaults>
</compile_context>

<pallas_src>
import functools

import numpy as np
import jax
import jax.numpy as jnp
from jax import lax
from jax.experimental import pallas as pl
from jax.experimental.pallas import tpu as pltpu

EPS = 1e-5


# ------------------------- hardware-aware sizing --------------------------- #

def _vmem_limit_bytes():
    """Generation-aware VMEM limit: ~96 MiB on 128 MiB parts, ~48 MiB on v7x."""
    cap = 64 * 1024 * 1024
    try:
        cap = int(pltpu.get_tpu_info().vmem_capacity_bytes)
    except Exception:
        pass
    return min(int(cap * 3 // 4), 100 * 1024 * 1024)


def _row_block_size(Ho, Wo, cin, cmid, cout, vmem_budget, target_rows=256):
    """Smallest divisor of Ho whose row block reaches ~target_rows MXU rows
    while the per-step working set stays under vmem_budget."""
    def per_block_bytes(rb):
        return (2 * rb * Wo * cout * 4                # out block (double buffered)
                + (rb + 2) * (Wo + 2) * cmid * 2      # padded y1 scratch (bf16)
                + rb * Wo * 9 * cmid * 2              # im2col scratch (bf16)
                + rb * Wo * (cin + 2 * cmid + 2 * cout) * 4)  # live-value headroom
    divisors = [d for d in range(1, Ho + 1) if Ho % d == 0]
    best = divisors[0]
    for rb in divisors:
        if per_block_bytes(rb) > vmem_budget:
            break
        best = rb
        if rb * Wo >= target_rows:
            break
    return best


# ------------------------------ Pallas kernel ------------------------------ #

def _bottleneck_body(x_ref, w1_ref, b1_ref, w2_ref, b2_ref, w3_ref, b3_ref,
                     o_ref, ypad_ref, col_ref, *, rb, wd_ref=None, bd_ref=None):
    """Fully fused Bottleneck forward for one (image, row-block) grid step.

    x_ref : (1, Ho, Wo, Cin)  resident strided input image (f32 or bf16)
    w1    : (Cin, cmid) bf16      b1: (1, cmid) f32        (bn1 folded)
    w2    : (9*cmid, cmid) bf16   b2: (1, cmid) f32        (bn2 folded)
    w3    : (cmid, cout) bf16     b3: (1, cout) f32        (bn3 folded)
    wd/bd : downsample 1x1 conv (+bnd folded), or None for identity residual
    o_ref : (1, rb, Wo, cout) f32
    ypad  : (rb+2, Wo+2, cmid) bf16 VMEM scratch (conv2 input with halo)
    col   : (rb*Wo, 9*cmid)  bf16 VMEM scratch (im2col for conv2)
    """
    Ho, Wo, Cin = x_ref.shape[1], x_ref.shape[2], x_ref.shape[3]
    cmid = w1_ref.shape[1]
    cout = w3_ref.shape[1]
    r0 = pl.multiple_of(pl.program_id(1) * rb, rb)

    w1 = w1_ref[...]
    b1 = b1_ref[...]

    def conv1(x2d):
        y = jnp.dot(x2d.astype(jnp.bfloat16), w1, preferred_element_type=jnp.float32)
        return jnp.maximum(y + b1, 0.0).astype(jnp.bfloat16)

    # ---- conv1 + bn1 + relu into the padded scratch; zero only the border ----
    ypad_ref[:, 0:1, :] = jnp.zeros((rb + 2, 1, cmid), jnp.bfloat16)
    ypad_ref[:, Wo + 1:Wo + 2, :] = jnp.zeros((rb + 2, 1, cmid), jnp.bfloat16)
    ypad_ref[0:1, 1:Wo + 1, :] = jnp.zeros((1, Wo, cmid), jnp.bfloat16)
    ypad_ref[rb + 1:rb + 2, 1:Wo + 1, :] = jnp.zeros((1, Wo, cmid), jnp.bfloat16)

    xm = x_ref[0, pl.ds(r0, rb)]                           # (rb, Wo, Cin)
    y1 = conv1(xm.reshape(rb * Wo, Cin))
    ypad_ref[1:rb + 1, 1:Wo + 1, :] = y1.reshape(rb, Wo, cmid)

    @pl.when(r0 > 0)                                       # top halo row (recompute)
    def _():
        xt = x_ref[0, pl.ds(r0 - 1, 1)].reshape(Wo, Cin)
        ypad_ref[0:1, 1:Wo + 1, :] = conv1(xt).reshape(1, Wo, cmid)

    @pl.when(r0 + rb < Ho)                                 # bottom halo row
    def _():
        xb = x_ref[0, pl.ds(r0 + rb, 1)].reshape(Wo, Cin)
        ypad_ref[rb + 1:rb + 2, 1:Wo + 1, :] = conv1(xb).reshape(1, Wo, cmid)

    # ---- conv2 (3x3) as ONE im2col matmul: (rb*Wo, 9*cmid) @ (9*cmid, cmid) ----
    for dy in range(3):
        for dx in range(3):
            k = dy * 3 + dx
            col_ref[:, k * cmid:(k + 1) * cmid] = (
                ypad_ref[dy:dy + rb, dx:dx + Wo, :].reshape(rb * Wo, cmid))
    h = jnp.dot(col_ref[...], w2_ref[...], preferred_element_type=jnp.float32)
    h = jnp.maximum(h + b2_ref[...], 0.0).astype(jnp.bfloat16)   # bn2 folded + relu

    # ---- conv3 (1x1) + bn3 ----
    y = jnp.dot(h, w3_ref[...], preferred_element_type=jnp.float32) + b3_ref[...]

    # ---- residual + final relu (residual never round-trips HBM) ----
    if wd_ref is None:
        res = xm.reshape(rb * Wo, Cin).astype(jnp.float32)       # identity, Cin == cout
    else:
        res = jnp.dot(xm.reshape(rb * Wo, Cin).astype(jnp.bfloat16), wd_ref[...],
                      preferred_element_type=jnp.float32) + bd_ref[...]
    out = jnp.maximum(y + res, 0.0)
    o_ref[...] = out.reshape(1, rb, Wo, cout).astype(o_ref.dtype)


def _bottleneck_id_kernel(x_ref, w1_ref, b1_ref, w2_ref, b2_ref, w3_ref, b3_ref,
                          o_ref, ypad_ref, col_ref, *, rb):
    _bottleneck_body(x_ref, w1_ref, b1_ref, w2_ref, b2_ref, w3_ref, b3_ref,
                     o_ref, ypad_ref, col_ref, rb=rb)


def _bottleneck_ds_kernel(x_ref, w1_ref, b1_ref, w2_ref, b2_ref, w3_ref, b3_ref,
                          wd_ref, bd_ref, o_ref, ypad_ref, col_ref, *, rb):
    _bottleneck_body(x_ref, w1_ref, b1_ref, w2_ref, b2_ref, w3_ref, b3_ref,
                     o_ref, ypad_ref, col_ref, rb=rb, wd_ref=wd_ref, bd_ref=bd_ref)


# ------------------------------ kernel wrapper ------------------------------ #

def _bottleneck_pallas(xs, w1, b1, w2f, b2, w3, b3, wd=None, bd=None):
    N, Ho, Wo, Cin = xs.shape
    cmid = w1.shape[1]
    cout = w3.shape[1]
    has_ds = wd is not None

    vmem_limit = _vmem_limit_bytes()
    rb = _row_block_size(Ho, Wo, Cin, cmid, cout,
                         vmem_budget=min(16 * 1024 * 1024, vmem_limit // 3))
    nb = Ho // rb

    in_specs = [
        # whole (strided) image stays resident while the row-block axis varies
        pl.BlockSpec((1, Ho, Wo, Cin), lambda n, j: (n, 0, 0, 0)),
        pl.BlockSpec((Cin, cmid), lambda n, j: (0, 0)),
        pl.BlockSpec((1, cmid), lambda n, j: (0, 0)),
        pl.BlockSpec((9 * cmid, cmid), lambda n, j: (0, 0)),
        pl.BlockSpec((1, cmid), lambda n, j: (0, 0)),
        pl.BlockSpec((cmid, cout), lambda n, j: (0, 0)),
        pl.BlockSpec((1, cout), lambda n, j: (0, 0)),
    ]
    operands = [xs, w1, b1, w2f, b2, w3, b3]
    if has_ds:
        in_specs += [pl.BlockSpec((Cin, cout), lambda n, j: (0, 0)),
                     pl.BlockSpec((1, cout), lambda n, j: (0, 0))]
        operands += [wd, bd]
        kernel = functools.partial(_bottleneck_ds_kernel, rb=rb)
    else:
        kernel = functools.partial(_bottleneck_id_kernel, rb=rb)

    return pl.pallas_call(
        kernel,
        out_shape=jax.ShapeDtypeStruct((N, Ho, Wo, cout), jnp.float32),
        grid=(N, nb),
        in_specs=in_specs,
        out_specs=pl.BlockSpec((1, rb, Wo, cout), lambda n, j: (n, j, 0, 0)),
        scratch_shapes=[pltpu.VMEM((rb + 2, Wo + 2, cmid), jnp.bfloat16),
                        pltpu.VMEM((rb * Wo, 9 * cmid), jnp.bfloat16)],
        compiler_params=pltpu.CompilerParams(
            dimension_semantics=("parallel", "parallel"),
            vmem_limit_bytes=vmem_limit),
    )(*operands)


# ------------------------------- parameters -------------------------------- #

def init_params(key, in_channels, out_channels, stride):
    cmid = out_channels // 4
    ks = jax.random.split(key, 24)

    def nrm(k, shape, s=0.1):
        return s * jax.random.normal(k, shape, jnp.float32)

    def bn(k1, k2, k3, k4, c):
        return dict(gamma=1.0 + nrm(k1, (c,)), beta=nrm(k2, (c,)),
                    mean=nrm(k3, (c,)), var=jnp.abs(nrm(k4, (c,))) + 1.0)

    p = dict(stride=stride)
    # Conv weights stored directly in matmul / HWIO form.
    p['w1'] = nrm(ks[0], (in_channels, cmid));   p['b1'] = nrm(ks[1], (cmid,))
    p['w2'] = nrm(ks[2], (3, 3, cmid, cmid));    p['b2'] = nrm(ks[3], (cmid,))
    p['w3'] = nrm(ks[4], (cmid, out_channels));  p['b3'] = nrm(ks[5], (out_channels,))
    p['bn1'] = bn(ks[6], ks[7], ks[8], ks[9], cmid)
    p['bn2'] = bn(ks[10], ks[11], ks[12], ks[13], cmid)
    p['bn3'] = bn(ks[14], ks[15], ks[16], ks[17], out_channels)
    p['has_downsample'] = (stride != 1 or in_channels != out_channels)
    if p['has_downsample']:
        p['wd'] = nrm(ks[18], (in_channels, out_channels))
        p['bd'] = nrm(ks[19], (out_channels,))
        p['bnd'] = bn(ks[20], ks[21], ks[22], ks[23], out_channels)
    return p


def _fold(w, b, bn):
    """Fold the BN affine into the conv weight (bf16) and bias (f32)."""
    scale = bn['gamma'] / jnp.sqrt(bn['var'] + EPS)        # per output channel
    wf = (w * scale).astype(jnp.bfloat16)                  # broadcast on last axis
    bf = (bn['beta'] + (b - bn['mean']) * scale).reshape(1, -1).astype(jnp.float32)
    return wf, bf


# ------------------------------ forward pass -------------------------------- #

def bottleneck_forward(x_nchw, p):
    s = p['stride']
    cmid = p['w1'].shape[1]

    # conv1 / downsample stride == input subsampling (stride sits on conv1 in this
    # module).  Fuse the subsample + NCHW->NHWC relayout into one XLA pass.
    # Downsample path: cast to bf16 (halves the HBM read; its residual is
    # recomputed in-kernel with f32 accumulation).  Identity path: keep f32 so the
    # residual add is exact; the bf16 cast for the matmuls happens in-kernel.
    xs = jnp.transpose(x_nchw[:, :, ::s, ::s], (0, 2, 3, 1))

    w1, b1 = _fold(p['w1'], p['b1'], p['bn1'])
    w2, b2 = _fold(p['w2'].reshape(9 * cmid, cmid), p['b2'], p['bn2'])
    w3, b3 = _fold(p['w3'], p['b3'], p['bn3'])

    if p['has_downsample']:
        wd, bd = _fold(p['wd'], p['bd'], p['bnd'])
        out = _bottleneck_pallas(xs.astype(jnp.bfloat16), w1, b1, w2, b2, w3, b3, wd, bd)
    else:
        out = _bottleneck_pallas(xs.astype(jnp.float32), w1, b1, w2, b2, w3, b3)

    # Module contract is NCHW; an NHWC consumer could skip this relayout.
    return jnp.transpose(out, (0, 3, 1, 2))


# ------------------------------ JAX reference -------------------------------- #

def reference_forward(x_nchw, p):
    x = jnp.transpose(x_nchw, (0, 2, 3, 1)).astype(jnp.float32)
    dn = ('NHWC', 'HWIO', 'NHWC')

    def conv(v, w_hwio, b, stride, pad):
        y = lax.conv_general_dilated(v, w_hwio, (stride, stride), pad,
                                     dimension_numbers=dn)
        return y + b

    def bn(y, q):
        return (y - q['mean']) / jnp.sqrt(q['var'] + EPS) * q['gamma'] + q['beta']

    cin, cmid = p['w1'].shape
    cout = p['w3'].shape[1]
    s = p['stride']

    out = conv(x, p['w1'].reshape(1, 1, cin, cmid), p['b1'], s, 'VALID')
    out = jax.nn.relu(bn(out, p['bn1']))
    out = conv(out, p['w2'], p['b2'], 1, [(1, 1), (1, 1)])
    out = jax.nn.relu(bn(out, p['bn2']))
    out = conv(out, p['w3'].reshape(1, 1, cmid, cout), p['b3'], 1, 'VALID')
    out = bn(out, p['bn3'])
    if p['has_downsample']:
        res = conv(x, p['wd'].reshape(1, 1, cin, cout), p['bd'], s, 'VALID')
        res = bn(res, p['bnd'])
    else:
        res = x
    out = jax.nn.relu(out + res)
    return jnp.transpose(out, (0, 3, 1, 2))


# ---------------------------------- main ------------------------------------ #

if __name__ == "__main__":
    key = jax.random.PRNGKey(0)

    configs = [
        (8, 32, 2, 16, 16),      # downsample path (stride 2, channel change)
        (32, 32, 1, 32, 16),     # identity residual; >1 row block -> exercises halo
        (128, 256, 2, 16, 16),   # downsample with >=128-lane channel widths
    ]
    for idx, (cin, cout, stride, H, W) in enumerate(configs):
        kx, kp = jax.random.split(jax.random.fold_in(key, idx))
        x = jax.random.normal(kx, (2, cin, H, W), jnp.float32)   # NCHW input
        params = init_params(kp, cin, cout, stride)

        fwd = jax.jit(lambda xx, p=params: bottleneck_forward(xx, p))
        out = jax.block_until_ready(fwd(x))
        ref = reference_forward(x, params)
        np.testing.assert_allclose(np.asarray(out), np.asarray(ref),
                                   rtol=2e-2, atol=2e-2)
        assert out.shape == (2, cout, H // stride, W // stride)

    print("KERNEL_OK")
</pallas_src>

<mosaic_0001>
module attributes {stable_mosaic.version = 11 : i64} {
  func.func @_bottleneck_ds_kernel(%arg0: i32, %arg1: i32, %arg2: memref<1x8x8x8xbf16, #tpu.memory_space<vmem>>, %arg3: memref<8x8xbf16, #tpu.memory_space<vmem>>, %arg4: memref<1x8xf32, #tpu.memory_space<vmem>>, %arg5: memref<72x8xbf16, #tpu.memory_space<vmem>>, %arg6: memref<1x8xf32, #tpu.memory_space<vmem>>, %arg7: memref<8x32xbf16, #tpu.memory_space<vmem>>, %arg8: memref<1x32xf32, #tpu.memory_space<vmem>>, %arg9: memref<8x32xbf16, #tpu.memory_space<vmem>>, %arg10: memref<1x32xf32, #tpu.memory_space<vmem>>, %arg11: memref<1x8x8x32xf32, #tpu.memory_space<vmem>>, %arg12: memref<10x10x8xbf16, #tpu.memory_space<vmem>>, %arg13: memref<64x72xbf16, #tpu.memory_space<vmem>>) attributes {dimension_semantics = [#tpu.dimension_semantics<parallel>, #tpu.dimension_semantics<parallel>], iteration_bounds = array<i64: 2, 1>, scalar_prefetch = 0 : i64, scratch_operands = 2 : i64, tpu.core_type = #tpu.core_type<tc>, window_params = [{transform_indices = @transform_0, window_bounds = array<i64: 1, 8, 8, 8>}, {pipeline_mode = #tpu.pipeline_mode<synchronous>, transform_indices = @transform_1, window_bounds = array<i64: 8, 8>}, {pipeline_mode = #tpu.pipeline_mode<synchronous>, transform_indices = @transform_2, window_bounds = array<i64: 1, 8>}, {pipeline_mode = #tpu.pipeline_mode<synchronous>, transform_indices = @transform_3, window_bounds = array<i64: 72, 8>}, {pipeline_mode = #tpu.pipeline_mode<synchronous>, transform_indices = @transform_4, window_bounds = array<i64: 1, 8>}, {pipeline_mode = #tpu.pipeline_mode<synchronous>, transform_indices = @transform_5, window_bounds = array<i64: 8, 32>}, {pipeline_mode = #tpu.pipeline_mode<synchronous>, transform_indices = @transform_6, window_bounds = array<i64: 1, 32>}, {pipeline_mode = #tpu.pipeline_mode<synchronous>, transform_indices = @transform_7, window_bounds = array<i64: 8, 32>}, {pipeline_mode = #tpu.pipeline_mode<synchronous>, transform_indices = @transform_8, window_bounds = array<i64: 1, 32>}, {transform_indices = @transform_9, window_bounds = array<i64: 1, 8, 8, 32>}]} {
    %c8_i32 = arith.constant 8 : i32
    %0 = arith.muli %arg1, %c8_i32 : i32
    %1 = tpu.assume_multiple %0, 8 : i32
    %c0 = arith.constant 0 : index
    %c0_0 = arith.constant 0 : index
    %2 = vector.load %arg3[%c0, %c0_0] : memref<8x8xbf16, #tpu.memory_space<vmem>>, vector<8x8xbf16>
    %c0_1 = arith.constant 0 : index
    %c0_2 = arith.constant 0 : index
    %3 = vector.load %arg4[%c0_1, %c0_2] : memref<1x8xf32, #tpu.memory_space<vmem>>, vector<1x8xf32>
    %cst = arith.constant 0.000000e+00 : bf16
    %4 = vector.broadcast %cst : bf16 to vector<10x1x8xbf16>
    %c0_3 = arith.constant 0 : index
    %c0_4 = arith.constant 0 : index
    %c0_5 = arith.constant 0 : index
    %5 = vector.load %arg12[%c0_3, %c0_4, %c0_5] : memref<10x10x8xbf16, #tpu.memory_space<vmem>>, vector<10x1x8xbf16>
    tpu.vector_store %arg12[%c0_3, %c0_4, %c0_5], %4 {strides = array<i32>} : memref<10x10x8xbf16, #tpu.memory_space<vmem>>, vector<10x1x8xbf16>,
    %cst_6 = arith.constant 0.000000e+00 : bf16
    %6 = vector.broadcast %cst_6 : bf16 to vector<10x1x8xbf16>
    %c0_7 = arith.constant 0 : index
    %c9 = arith.constant 9 : index
    %c0_8 = arith.constant 0 : index
    %7 = vector.load %arg12[%c0_7, %c9, %c0_8] : memref<10x10x8xbf16, #tpu.memory_space<vmem>>, vector<10x1x8xbf16>
    tpu.vector_store %arg12[%c0_7, %c9, %c0_8], %6 {strides = array<i32>} : memref<10x10x8xbf16, #tpu.memory_space<vmem>>, vector<10x1x8xbf16>,
    %cst_9 = arith.constant 0.000000e+00 : bf16
    %8 = vector.broadcast %cst_9 : bf16 to vector<1x8x8xbf16>
    %c0_10 = arith.constant 0 : index
    %c1 = arith.constant 1 : index
    %c0_11 = arith.constant 0 : index
    %9 = vector.load %arg12[%c0_10, %c1, %c0_11] : memref<10x10x8xbf16, #tpu.memory_space<vmem>>, vector<1x8x8xbf16>
    tpu.vector_store %arg12[%c0_10, %c1, %c0_11], %8 {strides = array<i32>} : memref<10x10x8xbf16, #tpu.memory_space<vmem>>, vector<1x8x8xbf16>,
    %cst_12 = arith.constant 0.000000e+00 : bf16
    %10 = vector.broadcast %cst_12 : bf16 to vector<1x8x8xbf16>
    %c9_13 = arith.constant 9 : index
    %c1_14 = arith.constant 1 : index
    %c0_15 = arith.constant 0 : index
    %11 = vector.load %arg12[%c9_13, %c1_14, %c0_15] : memref<10x10x8xbf16, #tpu.memory_space<vmem>>, vector<1x8x8xbf16>
    tpu.vector_store %arg12[%c9_13, %c1_14, %c0_15], %10 {strides = array<i32>} : memref<10x10x8xbf16, #tpu.memory_space<vmem>>, vector<1x8x8xbf16>,
    %c0_16 = arith.constant 0 : index
    %12 = arith.index_cast %1 : i32 to index
    %c0_17 = arith.constant 0 : index
    %c0_18 = arith.constant 0 : index
    %13 = vector.load %arg2[%c0_16, %12, %c0_17, %c0_18] : memref<1x8x8x8xbf16, #tpu.memory_space<vmem>>, vector<1x8x8x8xbf16>
    %14 = vector.shape_cast %13 : vector<1x8x8x8xbf16> to vector<8x8x8xbf16>
    %15 = vector.shape_cast %14 : vector<8x8x8xbf16> to vector<64x8xbf16>
    %cst_19 = arith.constant dense<0.000000e+00> : vector<64x8xf32>
    %16 = tpu.matmul %15, %2, %cst_19 {dimension_numbers = #tpu.dot_dimension_numbers<[1], [0], [0], [1], [0, 0, 1, 1], [], []>} : vector<64x8xbf16>, vector<8x8xbf16>, vector<64x8xf32> -> vector<64x8xf32>
    %17 = vector.broadcast %3 : vector<1x8xf32> to vector<64x8xf32>
    %18 = arith.addf %16, %17 : vector<64x8xf32>
    %cst_20 = arith.constant 0.000000e+00 : f32
    %19 = vector.broadcast %cst_20 : f32 to vector<64x8xf32>
    %20 = arith.maximumf %18, %19 : vector<64x8xf32>
    %21 = arith.truncf %20 : vector<64x8xf32> to vector<64x8xbf16>
    %22 = vector.shape_cast %21 : vector<64x8xbf16> to vector<8x8x8xbf16>
    %c1_21 = arith.constant 1 : index
    %c1_22 = arith.constant 1 : index
    %c0_23 = arith.constant 0 : index
    %23 = vector.load %arg12[%c1_21, %c1_22, %c0_23] : memref<10x10x8xbf16, #tpu.memory_space<vmem>>, vector<8x8x8xbf16>
    tpu.vector_store %arg12[%c1_21, %c1_22, %c0_23], %22 {strides = array<i32>} : memref<10x10x8xbf16, #tpu.memory_space<vmem>>, vector<8x8x8xbf16>,
    %c0_i32 = arith.constant 0 : i32
    %24 = arith.cmpi sgt, %1, %c0_i32 : i32
    %25 = arith.extui %24 : i1 to i32
    %c0_i32_24 = arith.constant 0 : i32
    %26 = arith.cmpi ne, %25, %c0_i32_24 : i32
    scf.if %26 {
      %c1_i32 = arith.constant 1 : i32
      %83 = arith.subi %1, %c1_i32 : i32
      %c0_87 = arith.constant 0 : index
      %84 = arith.index_cast %83 : i32 to index
      %c0_88 = arith.constant 0 : index
      %c0_89 = arith.constant 0 : index
      %85 = vector.load %arg2[%c0_87, %84, %c0_88, %c0_89] : memref<1x8x8x8xbf16, #tpu.memory_space<vmem>>, vector<1x1x8x8xbf16>
      %86 = vector.shape_cast %85 : vector<1x1x8x8xbf16> to vector<1x8x8xbf16>
      %87 = vector.shape_cast %86 : vector<1x8x8xbf16> to vector<8x8xbf16>
      %cst_90 = arith.constant dense<0.000000e+00> : vector<8x8xf32>
      %88 = tpu.matmul %87, %2, %cst_90 {dimension_numbers = #tpu.dot_dimension_numbers<[1], [0], [0], [1], [0, 0, 1, 1], [], []>} : vector<8x8xbf16>, vector<8x8xbf16>, vector<8x8xf32> -> vector<8x8xf32>
      %89 = vector.broadcast %3 : vector<1x8xf32> to vector<8x8xf32>
      %90 = arith.addf %88, %89 : vector<8x8xf32>
      %cst_91 = arith.constant 0.000000e+00 : f32
      %91 = vector.broadcast %cst_91 : f32 to vector<8x8xf32>
      %92 = arith.maximumf %90, %91 : vector<8x8xf32>
      %93 = arith.truncf %92 : vector<8x8xf32> to vector<8x8xbf16>
      %94 = vector.shape_cast %93 : vector<8x8xbf16> to vector<1x8x8xbf16>
      %c0_92 = arith.constant 0 : index
      %c1_93 = arith.constant 1 : index
      %c0_94 = arith.constant 0 : index
      %95 = vector.load %arg12[%c0_92, %c1_93, %c0_94] : memref<10x10x8xbf16, #tpu.memory_space<vmem>>, vector<1x8x8xbf16>
      tpu.vector_store %arg12[%c0_92, %c1_93, %c0_94], %94 {strides = array<i32>} : memref<10x10x8xbf16, #tpu.memory_space<vmem>>, vector<1x8x8xbf16>,
    } else {
    }
    %c8_i32_25 = arith.constant 8 : i32
    %27 = arith.addi %1, %c8_i32_25 : i32
    %c8_i32_26 = arith.constant 8 : i32
    %28 = arith.cmpi slt, %27, %c8_i32_26 : i32
    %29 = arith.extui %28 : i1 to i32
    %c0_i32_27 = arith.constant 0 : i32
    %30 = arith.cmpi ne, %29, %c0_i32_27 : i32
    scf.if %30 {
      %c8_i32_87 = arith.constant 8 : i32
      %83 = arith.addi %1, %c8_i32_87 : i32
      %c0_88 = arith.constant 0 : index
      %84 = arith.index_cast %83 : i32 to index
      %c0_89 = arith.constant 0 : index
      %c0_90 = arith.constant 0 : index
      %85 = vector.load %arg2[%c0_88, %84, %c0_89, %c0_90] : memref<1x8x8x8xbf16, #tpu.memory_space<vmem>>, vector<1x1x8x8xbf16>
      %86 = vector.shape_cast %85 : vector<1x1x8x8xbf16> to vector<1x8x8xbf16>
      %87 = vector.shape_cast %86 : vector<1x8x8xbf16> to vector<8x8xbf16>
      %cst_91 = arith.constant dense<0.000000e+00> : vector<8x8xf32>
      %88 = tpu.matmul %87, %2, %cst_91 {dimension_numbers = #tpu.dot_dimension_numbers<[1], [0], [0], [1], [0, 0, 1, 1], [], []>} : vector<8x8xbf16>, vector<8x8xbf16>, vector<8x8xf32> -> vector<8x8xf32>
      %89 = vector.broadcast %3 : vector<1x8xf32> to vector<8x8xf32>
      %90 = arith.addf %88, %89 : vector<8x8xf32>
      %cst_92 = arith.constant 0.000000e+00 : f32
      %91 = vector.broadcast %cst_92 : f32 to vector<8x8xf32>
      %92 = arith.maximumf %90, %91 : vector<8x8xf32>
      %93 = arith.truncf %92 : vector<8x8xf32> to vector<8x8xbf16>
      %94 = vector.shape_cast %93 : vector<8x8xbf16> to vector<1x8x8xbf16>
      %c9_93 = arith.constant 9 : index
      %c1_94 = arith.constant 1 : index
      %c0_95 = arith.constant 0 : index
      %95 = vector.load %arg12[%c9_93, %c1_94, %c0_95] : memref<10x10x8xbf16, #tpu.memory_space<vmem>>, vector<1x8x8xbf16>
      tpu.vector_store %arg12[%c9_93, %c1_94, %c0_95], %94 {strides = array<i32>} : memref<10x10x8xbf16, #tpu.memory_space<vmem>>, vector<1x8x8xbf16>,
    } else {
    }
    %c0_28 = arith.constant 0 : index
    %c0_29 = arith.constant 0 : index
    %c0_30 = arith.constant 0 : index
    %31 = vector.load %arg12[%c0_28, %c0_29, %c0_30] : memref<10x10x8xbf16, #tpu.memory_space<vmem>>, vector<8x8x8xbf16>
    %32 = vector.shape_cast %31 : vector<8x8x8xbf16> to vector<64x8xbf16>
    %c0_31 = arith.constant 0 : index
    %c0_32 = arith.constant 0 : index
    %33 = vector.load %arg13[%c0_31, %c0_32] : memref<64x72xbf16, #tpu.memory_space<vmem>>, vector<64x8xbf16>
    tpu.vector_store %arg13[%c0_31, %c0_32], %32 {strides = array<i32>} : memref<64x72xbf16, #tpu.memory_space<vmem>>, vector<64x8xbf16>,
    %c0_33 = arith.constant 0 : index
    %c1_34 = arith.constant 1 : index
    %c0_35 = arith.constant 0 : index
    %34 = vector.load %arg12[%c0_33, %c1_34, %c0_35] : memref<10x10x8xbf16, #tpu.memory_space<vmem>>, vector<8x8x8xbf16>
    %35 = vector.shape_cast %34 : vector<8x8x8xbf16> to vector<64x8xbf16>
    %c0_36 = arith.constant 0 : index
    %c8 = arith.constant 8 : index
    %36 = vector.load %arg13[%c0_36, %c8] : memref<64x72xbf16, #tpu.memory_space<vmem>>, vector<64x8xbf16>
    tpu.vector_store %arg13[%c0_36, %c8], %35 {strides = array<i32>} : memref<64x72xbf16, #tpu.memory_space<vmem>>, vector<64x8xbf16>,
    %c0_37 = arith.constant 0 : index
    %c2 = arith.constant 2 : index
    %c0_38 = arith.constant 0 : index
    %37 = vector.load %arg12[%c0_37, %c2, %c0_38] : memref<10x10x8xbf16, #tpu.memory_space<vmem>>, vector<8x8x8xbf16>
    %38 = vector.shape_cast %37 : vector<8x8x8xbf16> to vector<64x8xbf16>
    %c0_39 = arith.constant 0 : index
    %c16 = arith.constant 16 : index
    %39 = vector.load %arg13[%c0_39, %c16] : memref<64x72xbf16, #tpu.memory_space<vmem>>, vector<64x8xbf16>
    tpu.vector_store %arg13[%c0_39, %c16], %38 {strides = array<i32>} : memref<64x72xbf16, #tpu.memory_space<vmem>>, vector<64x8xbf16>,
    %c1_40 = arith.constant 1 : index
    %c0_41 = arith.constant 0 : index
    %c0_42 = arith.constant 0 : index
    %40 = vector.load %arg12[%c1_40, %c0_41, %c0_42] : memref<10x10x8xbf16, #tpu.memory_space<vmem>>, vector<8x8x8xbf16>
    %41 = vector.shape_cast %40 : vector<8x8x8xbf16> to vector<64x8xbf16>
    %c0_43 = arith.constant 0 : index
    %c24 = arith.constant 24 : index
    %42 = vector.load %arg13[%c0_43, %c24] : memref<64x72xbf16, #tpu.memory_space<vmem>>, vector<64x8xbf16>
    tpu.vector_store %arg13[%c0_43, %c24], %41 {strides = array<i32>} : memref<64x72xbf16, #tpu.memory_space<vmem>>, vector<64x8xbf16>,
    %c1_44 = arith.constant 1 : index
    %c1_45 = arith.constant 1 : index
    %c0_46 = arith.constant 0 : index
    %43 = vector.load %arg12[%c1_44, %c1_45, %c0_46] : memref<10x10x8xbf16, #tpu.memory_space<vmem>>, vector<8x8x8xbf16>
    %44 = vector.shape_cast %43 : vector<8x8x8xbf16> to vector<64x8xbf16>
    %c0_47 = arith.constant 0 : index
    %c32 = arith.constant 32 : index
    %45 = vector.load %arg13[%c0_47, %c32] : memref<64x72xbf16, #tpu.memory_space<vmem>>, vector<64x8xbf16>
    tpu.vector_store %arg13[%c0_47, %c32], %44 {strides = array<i32>} : memref<64x72xbf16, #tpu.memory_space<vmem>>, vector<64x8xbf16>,
    %c1_48 = arith.constant 1 : index
    %c2_49 = arith.constant 2 : index
    %c0_50 = arith.constant 0 : index
    %46 = vector.load %arg12[%c1_48, %c2_49, %c0_50] : memref<10x10x8xbf16, #tpu.memory_space<vmem>>, vector<8x8x8xbf16>
    %47 = vector.shape_cast %46 : vector<8x8x8xbf16> to vector<64x8xbf16>
    %c0_51 = arith.constant 0 : index
    %c40 = arith.constant 40 : index
    %48 = vector.load %arg13[%c0_51, %c40] : memref<64x72xbf16, #tpu.memory_space<vmem>>, vector<64x8xbf16>
    tpu.vector_store %arg13[%c0_51, %c40], %47 {strides = array<i32>} : memref<64x72xbf16, #tpu.memory_space<vmem>>, vector<64x8xbf16>,
    %c2_52 = arith.constant 2 : index
    %c0_53 = arith.constant 0 : index
    %c0_54 = arith.constant 0 : index
    %49 = vector.load %arg12[%c2_52, %c0_53, %c0_54] : memref<10x10x8xbf16, #tpu.memory_space<vmem>>, vector<8x8x8xbf16>
    %50 = vector.shape_cast %49 : vector<8x8x8xbf16> to vector<64x8xbf16>
    %c0_55 = arith.constant 0 : index
    %c48 = arith.constant 48 : index
    %51 = vector.load %arg13[%c0_55, %c48] : memref<64x72xbf16, #tpu.memory_space<vmem>>, vector<64x8xbf16>
    tpu.vector_store %arg13[%c0_55, %c48], %50 {strides = array<i32>} : memref<64x72xbf16, #tpu.memory_space<vmem>>, vector<64x8xbf16>,
    %c2_56 = arith.constant 2 : index
    %c1_57 = arith.constant 1 : index
    %c0_58 = arith.constant 0 : index
    %52 = vector.load %arg12[%c2_56, %c1_57, %c0_58] : memref<10x10x8xbf16, #tpu.memory_space<vmem>>, vector<8x8x8xbf16>
    %53 = vector.shape_cast %52 : vector<8x8x8xbf16> to vector<64x8xbf16>
    %c0_59 = arith.constant 0 : index
    %c56 = arith.constant 56 : index
    %54 = vector.load %arg13[%c0_59, %c56] : memref<64x72xbf16, #tpu.memory_space<vmem>>, vector<64x8xbf16>
    tpu.vector_store %arg13[%c0_59, %c56], %53 {strides = array<i32>} : memref<64x72xbf16, #tpu.memory_space<vmem>>, vector<64x8xbf16>,
    %c2_60 = arith.constant 2 : index
    %c2_61 = arith.constant 2 : index
    %c0_62 = arith.constant 0 : index
    %55 = vector.load %arg12[%c2_60, %c2_61, %c0_62] : memref<10x10x8xbf16, #tpu.memory_space<vmem>>, vector<8x8x8xbf16>
    %56 = vector.shape_cast %55 : vector<8x8x8xbf16> to vector<64x8xbf16>
    %c0_63 = arith.constant 0 : index
    %c64 = arith.constant 64 : index
    %57 = vector.load %arg13[%c0_63, %c64] : memref<64x72xbf16, #tpu.memory_space<vmem>>, vector<64x8xbf16>
    tpu.vector_store %arg13[%c0_63, %c64], %56 {strides = array<i32>} : memref<64x72xbf16, #tpu.memory_space<vmem>>, vector<64x8xbf16>,
    %c0_64 = arith.constant 0 : index
    %c0_65 = arith.constant 0 : index
    %58 = vector.load %arg13[%c0_64, %c0_65] : memref<64x72xbf16, #tpu.memory_space<vmem>>, vector<64x72xbf16>
    %c0_66 = arith.constant 0 : index
    %c0_67 = arith.constant 0 : index
    %59 = vector.load %arg5[%c0_66, %c0_67] : memref<72x8xbf16, #tpu.memory_space<vmem>>, vector<72x8xbf16>
    %cst_68 = arith.constant dense<0.000000e+00> : vector<64x8xf32>
    %60 = tpu.matmul %58, %59, %cst_68 {dimension_numbers = #tpu.dot_dimension_numbers<[1], [0], [0], [1], [0, 0, 1, 1], [], []>} : vector<64x72xbf16>, vector<72x8xbf16>, vector<64x8xf32> -> vector<64x8xf32>
    %c0_69 = arith.constant 0 : index
    %c0_70 = arith.constant 0 : index
    %61 = vector.load %arg6[%c0_69, %c0_70] : memref<1x8xf32, #tpu.memory_space<vmem>>, vector<1x8xf32>
    %62 = vector.broadcast %61 : vector<1x8xf32> to vector<64x8xf32>
    %63 = arith.addf %60, %62 : vector<64x8xf32>
    %cst_71 = arith.constant 0.000000e+00 : f32
    %64 = vector.broadcast %cst_71 : f32 to vector<64x8xf32>
    %65 = arith.maximumf %63, %64 : vector<64x8xf32>
    %66 = arith.truncf %65 : vector<64x8xf32> to vector<64x8xbf16>
    %c0_72 = arith.constant 0 : index
    %c0_73 = arith.constant 0 : index
    %67 = vector.load %arg7[%c0_72, %c0_73] : memref<8x32xbf16, #tpu.memory_space<vmem>>, vector<8x32xbf16>
    %cst_74 = arith.constant dense<0.000000e+00> : vector<64x32xf32>
    %68 = tpu.matmul %66, %67, %cst_74 {dimension_numbers = #tpu.dot_dimension_numbers<[1], [0], [0], [1], [0, 0, 1, 1], [], []>} : vector<64x8xbf16>, vector<8x32xbf16>, vector<64x32xf32> -> vector<64x32xf32>
    %c0_75 = arith.constant 0 : index
    %c0_76 = arith.constant 0 : index
    %69 = vector.load %arg8[%c0_75, %c0_76] : memref<1x32xf32, #tpu.memory_space<vmem>>, vector<1x32xf32>
    %70 = vector.broadcast %69 : vector<1x32xf32> to vector<64x32xf32>
    %71 = arith.addf %68, %70 : vector<64x32xf32>
    %72 = vector.shape_cast %14 : vector<8x8x8xbf16> to vector<64x8xbf16>
    %c0_77 = arith.constant 0 : index
    %c0_78 = arith.constant 0 : index
    %73 = vector.load %arg9[%c0_77, %c0_78] : memref<8x32xbf16, #tpu.memory_space<vmem>>, vector<8x32xbf16>
    %cst_79 = arith.constant dense<0.000000e+00> : vector<64x32xf32>
    %74 = tpu.matmul %72, %73, %cst_79 {dimension_numbers = #tpu.dot_dimension_numbers<[1], [0], [0], [1], [0, 0, 1, 1], [], []>} : vector<64x8xbf16>, vector<8x32xbf16>, vector<64x32xf32> -> vector<64x32xf32>
    %c0_80 = arith.constant 0 : index
    %c0_81 = arith.constant 0 : index
    %75 = vector.load %arg10[%c0_80, %c0_81] : memref<1x32xf32, #tpu.memory_space<vmem>>, vector<1x32xf32>
    %76 = vector.broadcast %75 : vector<1x32xf32> to vector<64x32xf32>
    %77 = arith.addf %74, %76 : vector<64x32xf32>
    %78 = arith.addf %71, %77 : vector<64x32xf32>
    %cst_82 = arith.constant 0.000000e+00 : f32
    %79 = vector.broadcast %cst_82 : f32 to vector<64x32xf32>
    %80 = arith.maximumf %78, %79 : vector<64x32xf32>
    %81 = vector.shape_cast %80 : vector<64x32xf32> to vector<1x8x8x32xf32>
    %c0_83 = arith.constant 0 : index
    %c0_84 = arith.constant 0 : index
    %c0_85 = arith.constant 0 : index
    %c0_86 = arith.constant 0 : index
    %82 = vector.load %arg11[%c0_83, %c0_84, %c0_85, %c0_86] : memref<1x8x8x32xf32, #tpu.memory_space<vmem>>, vector<1x8x8x32xf32>
    tpu.vector_store %arg11[%c0_83, %c0_84, %c0_85, %c0_86], %81 {strides = array<i32>} : memref<1x8x8x32xf32, #tpu.memory_space<vmem>>, vector<1x8x8x32xf32>,
    return
  }
  func.func @transform_0(%arg0: i32, %arg1: i32) -> (i32, i32, i32, i32) {
    %c0_i32 = arith.constant 0 : i32
    %c0_i32_0 = arith.constant 0 : i32
    %c0_i32_1 = arith.constant 0 : i32
    %c0_i32_2 = arith.constant 0 : i32
    return %arg0, %c0_i32, %c0_i32_0, %c0_i32_1 : i32, i32, i32, i32
  }
  func.func @transform_1(%arg0: i32, %arg1: i32) -> (i32, i32) {
    %c0_i32 = arith.constant 0 : i32
    %c0_i32_0 = arith.constant 0 : i32
    %c0_i32_1 = arith.constant 0 : i32
    return %c0_i32, %c0_i32_0 : i32, i32
  }
  func.func @transform_2(%arg0: i32, %arg1: i32) -> (i32, i32) {
    %c0_i32 = arith.constant 0 : i32
    %c0_i32_0 = arith.constant 0 : i32
    %c0_i32_1 = arith.constant 0 : i32
    return %c0_i32, %c0_i32_0 : i32, i32
  }
  func.func @transform_3(%arg0: i32, %arg1: i32) -> (i32, i32) {
    %c0_i32 = arith.constant 0 : i32
    %c0_i32_0 = arith.constant 0 : i32
    %c0_i32_1 = arith.constant 0 : i32
    return %c0_i32, %c0_i32_0 : i32, i32
  }
  func.func @transform_4(%arg0: i32, %arg1: i32) -> (i32, i32) {
    %c0_i32 = arith.constant 0 : i32
    %c0_i32_0 = arith.constant 0 : i32
    %c0_i32_1 = arith.constant 0 : i32
    return %c0_i32, %c0_i32_0 : i32, i32
  }
  func.func @transform_5(%arg0: i32, %arg1: i32) -> (i32, i32) {
    %c0_i32 = arith.constant 0 : i32
    %c0_i32_0 = arith.constant 0 : i32
    %c0_i32_1 = arith.constant 0 : i32
    return %c0_i32, %c0_i32_0 : i32, i32
  }
  func.func @transform_6(%arg0: i32, %arg1: i32) -> (i32, i32) {
    %c0_i32 = arith.constant 0 : i32
    %c0_i32_0 = arith.constant 0 : i32
    %c0_i32_1 = arith.constant 0 : i32
    return %c0_i32, %c0_i32_0 : i32, i32
  }
  func.func @transform_7(%arg0: i32, %arg1: i32) -> (i32, i32) {
    %c0_i32 = arith.constant 0 : i32
    %c0_i32_0 = arith.constant 0 : i32
    %c0_i32_1 = arith.constant 0 : i32
    return %c0_i32, %c0_i32_0 : i32, i32
  }
  func.func @transform_8(%arg0: i32, %arg1: i32) -> (i32, i32) {
    %c0_i32 = arith.constant 0 : i32
    %c0_i32_0 = arith.constant 0 : i32
    %c0_i32_1 = arith.constant 0 : i32
    return %c0_i32, %c0_i32_0 : i32, i32
  }
  func.func @transform_9(%arg0: i32, %arg1: i32) -> (i32, i32, i32, i32) {
    %c0_i32 = arith.constant 0 : i32
    %c0_i32_0 = arith.constant 0 : i32
    %c0_i32_1 = arith.constant 0 : i32
    return %arg0, %arg1, %c0_i32, %c0_i32_0 : i32, i32, i32, i32
  }
}

</mosaic_0001>

<llo_original>
// kernel: _lambda_.1
$region0: #{_lambda_.1}
  #allocation0 [shape = 'u32[]', space=smem, size = 0x4, offset = 0x4, fixed_abs, tag = 'smem constant byte address 0x4 - core index']
  #allocation1 [shape = 'u32[144,128]{1,0:T(1,128)}', space=vmem, size = 0x12000, scoped, tag = 'internal scratch']
  #allocation2 [shape = 'bf16[10,10,8]{2,1,0:T(8,128)(2,1)}', space=vmem, size = 0xa000, scoped, tag = 'scratch operand']
  #allocation3 [shape = 'bf16[64,72]{1,0:T(16,128)(2,1)}', space=vmem, size = 0x4000, scoped, tag = 'scratch operand']
  %s0 = inlined_call_operand.vmem [shape: bf16[2,8,8,8], index: 0, kind: input, shape index: {}]
  %s1 = inlined_call_operand.vmem [shape: bf16[8,8], index: 1, kind: input, shape index: {}]
  %s2 = inlined_call_operand.vmem [shape: f32[1,8], index: 2, kind: input, shape index: {}]
  %s3 = inlined_call_operand.vmem [shape: bf16[72,8], index: 3, kind: input, shape index: {}]
  %s4 = inlined_call_operand.vmem [shape: f32[1,8], index: 4, kind: input, shape index: {}]
  %s5 = inlined_call_operand.vmem [shape: bf16[8,32], index: 5, kind: input, shape index: {}]
  %s6 = inlined_call_operand.vmem [shape: f32[1,32], index: 6, kind: input, shape index: {}]
  %s7 = inlined_call_operand.vmem [shape: bf16[8,32], index: 7, kind: input, shape index: {}]
  %s8 = inlined_call_operand.vmem [shape: f32[1,32], index: 8, kind: input, shape index: {}]
  %s9 = inlined_call_operand.hbm [shape: f32[2,8,8,32], index: 9, kind: output, shape index: {}]
  %s10 = sld [smem:[#allocation0]]
  $region77: #{_lambda_.1} parent=0
    _
  %s12 = ssub.s32 1, %s10
  %s13 = scalar_select 0, %s12, %s10
  $region1: #{_lambda_.1} parent=0
    #allocation4 [shape = 'u8[65536]{0}', space=vmem, size = 0x10000, scoped, tag = 'output window, operand 0']
    #allocation5 [shape = 's32[2]{0}', space=sflag, size = 0x8, scoped, tag = 'scoped memory for _lambda_.1']
    %14 = vsyncpa [#allocation5], 0
    %s15 = scalar_lea.sflag [#allocation5], 1
    %16 = vsyncpa %s15, 0
    loop: start=0, step=1, limit=4
    $region2: #{_lambda_.1} parent=1 // loop_pre_header
      _
    $region3: #{_lambda_.1} parent=1 // loop_header
      %s18 = sphi 0, %s22
      %p19 = scmp.ge.s32.totalorder %s18, 4
      %s25 = sphi 0, %s37
      %s26 = sphi 0, %s33
      %s27 = sphi 0, %s25
      %s28 = sphi 0, %s26
      %s29 = sphi 0, %s27
      %s30 = sphi 0, %s28
      %s40 = sphi 0, %s42
      %s43 = sphi 0, %s40
      %s44 = sphi 0, %s43
      %s60 = sphi 0, %s44
      %s64 = sphi 0, %s64
      %s66 = sphi 0, %s64
      %s67 = sphi 0, %s66
      %s81 = sphi 0, %s67
      %s85 = sphi 0, %s85
      %s87 = sphi 0, %s85
      %s88 = sphi 0, %s87
      %s102 = sphi 0, %s88
      %s106 = sphi 0, %s106
      %s108 = sphi 0, %s106
      %s109 = sphi 0, %s108
      %s123 = sphi 0, %s109
      %s127 = sphi 0, %s127
      %s129 = sphi 0, %s127
      %s130 = sphi 0, %s129
      %s144 = sphi 0, %s130
      %s148 = sphi 0, %s148
      %s150 = sphi 0, %s148
      %s151 = sphi 0, %s150
      %s165 = sphi 0, %s151
      %s169 = sphi 0, %s169
      %s171 = sphi 0, %s169
      %s172 = sphi 0, %s171
      %s186 = sphi 0, %s172
      %s190 = sphi 0, %s190
      %s192 = sphi 0, %s190
      %s193 = sphi 0, %s192
      %s207 = sphi 0, %s193
      %s211 = sphi 0, %s211
      %s213 = sphi 0, %s211
      %s214 = sphi 0, %s213
      %s228 = sphi 0, %s214
      %s236 = sphi 0, %s238
      %s239 = sphi 0, %s236
      %s240 = sphi 0, %s239
      %s256 = sphi 0, %s240
    $region4: #{_lambda_.1} parent=1 // loop_header_branch
      %21 = sbr.rel (%p19) target = $region8
    $region5: #{_lambda_.1} parent=1 // loop_body
      %s23 = ssub.s32 %s18, 1
      %s24 = ssub.s32 %s18, 2
      %s31 = sadd.s32 1, %s26
      %p32 = scmp.ge.s32.totalorder %s31, 1
      %s33 = scalar_select %p32, 0, %s31
      %s34 = sadd.s32 1, %s25
      %s35 = scalar_select %p32, %s34, %s25
      %p36 = scmp.ge.s32.totalorder %s35, 2
      %s37 = scalar_select %p36, 0, %s35
      %s38 = ssub.s32 %s25, %s37
      %p39 = scmp.eq.s32.totalorder %s38, 0
      %s41 = sadd.s32 %s40, 1
      %s42 = scalar_select %p39, %s40, %s41
      %p45 = pneg %p39
      %p46 = scmp.eq.s32.totalorder %s18, 1
      %p47 = por %p45, %p46
      %p48 = scmp.ne.s32.totalorder %s40, %s43
      %p49 = scmp.eq.s32.totalorder %s18, 0
      %p50 = por %p48, %p49
      %p51 = scmp.ne.s32.totalorder %s40, %s43
      %p52 = scmp.eq.s32.totalorder %s23, 1
      %p53 = por %p51, %p52
      %p54 = scmp.ne.s32.totalorder %s43, %s44
      %p55 = scmp.eq.s32.totalorder %s23, 0
      %p56 = por %p54, %p55
      %p57 = scmp.ne.s32.totalorder %s43, %s44
      %p58 = scmp.eq.s32.totalorder %s24, 1
      %p59 = por %p57, %p58
      %p61 = scmp.ne.s32.totalorder %s44, %s60
      %p62 = scmp.eq.s32.totalorder %s24, 0
      %p63 = por %p61, %p62
      %s65 = sadd.s32 %s64, 1
      %p68 = scmp.eq.s32.totalorder %s18, 1
      %p69 = scmp.ne.s32.totalorder %s64, %s66
      %p70 = scmp.eq.s32.totalorder %s18, 0
      %p71 = por %p69, %p70
      %p72 = scmp.ne.s32.totalorder %s64, %s66
      %p73 = scmp.eq.s32.totalorder %s23, 1
      %p74 = por %p72, %p73
      %p75 = scmp.ne.s32.totalorder %s66, %s67
      %p76 = scmp.eq.s32.totalorder %s23, 0
      %p77 = por %p75, %p76
      %p78 = scmp.ne.s32.totalorder %s66, %s67
      %p79 = scmp.eq.s32.totalorder %s24, 1
      %p80 = por %p78, %p79
      %p82 = scmp.ne.s32.totalorder %s67, %s81
      %p83 = scmp.eq.s32.totalorder %s24, 0
      %p84 = por %p82, %p83
      %s86 = sadd.s32 %s85, 1
      %p89 = scmp.eq.s32.totalorder %s18, 1
      %p90 = scmp.ne.s32.totalorder %s85, %s87
      %p91 = scmp.eq.s32.totalorder %s18, 0
      %p92 = por %p90, %p91
      %p93 = scmp.ne.s32.totalorder %s85, %s87
      %p94 = scmp.eq.s32.totalorder %s23, 1
      %p95 = por %p93, %p94
      %p96 = scmp.ne.s32.totalorder %s87, %s88
      %p97 = scmp.eq.s32.totalorder %s23, 0
      %p98 = por %p96, %p97
      %p99 = scmp.ne.s32.totalorder %s87, %s88
      %p100 = scmp.eq.s32.totalorder %s24, 1
      %p101 = por %p99, %p100
      %p103 = scmp.ne.s32.totalorder %s88, %s102
      %p104 = scmp.eq.s32.totalorder %s24, 0
      %p105 = por %p103, %p104
      %s107 = sadd.s32 %s106, 1
      %p110 = scmp.eq.s32.totalorder %s18, 1
      %p111 = scmp.ne.s32.totalorder %s106, %s108
      %p112 = scmp.eq.s32.totalorder %s18, 0
      %p113 = por %p111, %p112
      %p114 = scmp.ne.s32.totalorder %s106, %s108
      %p115 = scmp.eq.s32.totalorder %s23, 1
      %p116 = por %p114, %p115
      %p117 = scmp.ne.s32.totalorder %s108, %s109
      %p118 = scmp.eq.s32.totalorder %s23, 0
      %p119 = por %p117, %p118
      %p120 = scmp.ne.s32.totalorder %s108, %s109
      %p121 = scmp.eq.s32.totalorder %s24, 1
      %p122 = por %p120, %p121
      %p124 = scmp.ne.s32.totalorder %s109, %s123
      %p125 = scmp.eq.s32.totalorder %s24, 0
      %p126 = por %p124, %p125
      %s128 = sadd.s32 %s127, 1
      %p131 = scmp.eq.s32.totalorder %s18, 1
      %p132 = scmp.ne.s32.totalorder %s127, %s129
      %p133 = scmp.eq.s32.totalorder %s18, 0
      %p134 = por %p132, %p133
      %p135 = scmp.ne.s32.totalorder %s127, %s129
      %p136 = scmp.eq.s32.totalorder %s23, 1
      %p137 = por %p135, %p136
      %p138 = scmp.ne.s32.totalorder %s129, %s130
      %p139 = scmp.eq.s32.totalorder %s23, 0
      %p140 = por %p138, %p139
      %p141 = scmp.ne.s32.totalorder %s129, %s130
      %p142 = scmp.eq.s32.totalorder %s24, 1
      %p143 = por %p141, %p142
      %p145 = scmp.ne.s32.totalorder %s130, %s144
      %p146 = scmp.eq.s32.totalorder %s24, 0
      %p147 = por %p145, %p146
      %s149 = sadd.s32 %s148, 1
      %p152 = scmp.eq.s32.totalorder %s18, 1
      %p153 = scmp.ne.s32.totalorder %s148, %s150
      %p154 = scmp.eq.s32.totalorder %s18, 0
      %p155 = por %p153, %p154
      %p156 = scmp.ne.s32.totalorder %s148, %s150
      %p157 = scmp.eq.s32.totalorder %s23, 1
      %p158 = por %p156, %p157
      %p159 = scmp.ne.s32.totalorder %s150, %s151
      %p160 = scmp.eq.s32.totalorder %s23, 0
      %p161 = por %p159, %p160
      %p162 = scmp.ne.s32.totalorder %s150, %s151
      %p163 = scmp.eq.s32.totalorder %s24, 1
      %p164 = por %p162, %p163
      %p166 = scmp.ne.s32.totalorder %s151, %s165
      %p167 = scmp.eq.s32.totalorder %s24, 0
      %p168 = por %p166, %p167
      %s170 = sadd.s32 %s169, 1
      %p173 = scmp.eq.s32.totalorder %s18, 1
      %p174 = scmp.ne.s32.totalorder %s169, %s171
      %p175 = scmp.eq.s32.totalorder %s18, 0
      %p176 = por %p174, %p175
      %p177 = scmp.ne.s32.totalorder %s169, %s171
      %p178 = scmp.eq.s32.totalorder %s23, 1
      %p179 = por %p177, %p178
      %p180 = scmp.ne.s32.totalorder %s171, %s172
      %p181 = scmp.eq.s32.totalorder %s23, 0
      %p182 = por %p180, %p181
      %p183 = scmp.ne.s32.totalorder %s171, %s172
      %p184 = scmp.eq.s32.totalorder %s24, 1
      %p185 = por %p183, %p184
      %p187 = scmp.ne.s32.totalorder %s172, %s186
      %p188 = scmp.eq.s32.totalorder %s24, 0
      %p189 = por %p187, %p188
      %s191 = sadd.s32 %s190, 1
      %p194 = scmp.eq.s32.totalorder %s18, 1
      %p195 = scmp.ne.s32.totalorder %s190, %s192
      %p196 = scmp.eq.s32.totalorder %s18, 0
      %p197 = por %p195, %p196
      %p198 = scmp.ne.s32.totalorder %s190, %s192
      %p199 = scmp.eq.s32.totalorder %s23, 1
      %p200 = por %p198, %p199
      %p201 = scmp.ne.s32.totalorder %s192, %s193
      %p202 = scmp.eq.s32.totalorder %s23, 0
      %p203 = por %p201, %p202
      %p204 = scmp.ne.s32.totalorder %s192, %s193
      %p205 = scmp.eq.s32.totalorder %s24, 1
      %p206 = por %p204, %p205
      %p208 = scmp.ne.s32.totalorder %s193, %s207
      %p209 = scmp.eq.s32.totalorder %s24, 0
      %p210 = por %p208, %p209
      %s212 = sadd.s32 %s211, 1
      %p215 = scmp.eq.s32.totalorder %s18, 1
      %p216 = scmp.ne.s32.totalorder %s211, %s213
      %p217 = scmp.eq.s32.totalorder %s18, 0
      %p218 = por %p216, %p217
      %p219 = scmp.ne.s32.totalorder %s211, %s213
      %p220 = scmp.eq.s32.totalorder %s23, 1
      %p221 = por %p219, %p220
      %p222 = scmp.ne.s32.totalorder %s213, %s214
      %p223 = scmp.eq.s32.totalorder %s23, 0
      %p224 = por %p222, %p223
      %p225 = scmp.ne.s32.totalorder %s213, %s214
      %p226 = scmp.eq.s32.totalorder %s24, 1
      %p227 = por %p225, %p226
      %p229 = scmp.ne.s32.totalorder %s214, %s228
      %p230 = scmp.eq.s32.totalorder %s24, 0
      %p231 = por %p229, %p230
      %s232 = ssub.s32 %s25, %s37
      %s233 = ssub.s32 %s26, %s33
      %s234 = sor.u32 %s232, %s233
      %p235 = scmp.eq.s32.totalorder %s234, 0
      %s237 = sadd.s32 %s236, 1
      %s238 = scalar_select %p235, %s236, %s237
      %p241 = pneg %p235
      %p242 = scmp.eq.s32.totalorder %s18, 1
      %p243 = por %p241, %p242
      %p244 = scmp.ne.s32.totalorder %s236, %s239
      %p245 = scmp.eq.s32.totalorder %s18, 0
      %p246 = por %p244, %p245
      %p247 = scmp.ne.s32.totalorder %s236, %s239
      %p248 = scmp.eq.s32.totalorder %s23, 1
      %p249 = por %p247, %p248
      %p250 = scmp.ne.s32.totalorder %s239, %s240
      %p251 = scmp.eq.s32.totalorder %s23, 0
      %p252 = por %p250, %p251
      %p253 = scmp.ne.s32.totalorder %s239, %s240
      %p254 = scmp.eq.s32.totalorder %s24, 1
      %p255 = por %p253, %p254
      %p257 = scmp.ne.s32.totalorder %s240, %s256
      %p258 = scmp.eq.s32.totalorder %s24, 0
      %p259 = por %p257, %p258
      %p260 = scmp.le.s32.totalorder 1, %s18
      %p261 = scmp.lt.s32.totalorder %s18, 3
      %p262 = pnand %p260, %p261
      %p263 = pneg %p262
      // Predicated region
      $region9: #{_lambda_.1} parent=5 // pred_check
        _
      $region10: #{_lambda_.1} parent=5 // pred_check_branch
        %265 = sbr.rel (%p262) target = $region12
      $region11: #{_lambda_.1} parent=5 // pred_region
        %s266 = ssub.s32 %s18, 1
        // Predicated region
        $region13: #{_lambda_.1} parent=11 // pred_check
          %p267 = pneg %p77
        $region14: #{_lambda_.1} parent=11 // pred_check_branch
          %269 = sbr.rel (%p267) target = $region16
        $region15: #{_lambda_.1} parent=11 // pred_region
          _
        $region16: #{_lambda_.1} parent=11 // pred_fallthru
          _
        // Predicated region
        $region17: #{_lambda_.1} parent=11 // pred_check
          %p270 = pneg %p98
        $region18: #{_lambda_.1} parent=11 // pred_check_branch
          %272 = sbr.rel (%p270) target = $region20
        $region19: #{_lambda_.1} parent=11 // pred_region
          _
        $region20: #{_lambda_.1} parent=11 // pred_fallthru
          _
        // Predicated region
        $region21: #{_lambda_.1} parent=11 // pred_check
          %p273 = pneg %p119
        $region22: #{_lambda_.1} parent=11 // pred_check_branch
          %275 = sbr.rel (%p273) target = $region24
        $region23: #{_lambda_.1} parent=11 // pred_region
          _
        $region24: #{_lambda_.1} parent=11 // pred_fallthru
          _
        // Predicated region
        $region25: #{_lambda_.1} parent=11 // pred_check
          %p276 = pneg %p140
        $region26: #{_lambda_.1} parent=11 // pred_check_branch
          %278 = sbr.rel (%p276) target = $region28
        $region27: #{_lambda_.1} parent=11 // pred_region
          _
        $region28: #{_lambda_.1} parent=11 // pred_fallthru
          _
        // Predicated region
        $region29: #{_lambda_.1} parent=11 // pred_check
          %p279 = pneg %p161
        $region30: #{_lambda_.1} parent=11 // pred_check_branch
          %281 = sbr.rel (%p279) target = $region32
        $region31: #{_lambda_.1} parent=11 // pred_region
          _
        $region32: #{_lambda_.1} parent=11 // pred_fallthru
          _
        // Predicated region
        $region33: #{_lambda_.1} parent=11 // pred_check
          %p282 = pneg %p182
        $region34: #{_lambda_.1} parent=11 // pred_check_branch
          %284 = sbr.rel (%p282) target = $region36
        $region35: #{_lambda_.1} parent=11 // pred_region
          _
        $region36: #{_lambda_.1} parent=11 // pred_fallthru
          _
        // Predicated region
        $region37: #{_lambda_.1} parent=11 // pred_check
          %p285 = pneg %p203
        $region38: #{_lambda_.1} parent=11 // pred_check_branch
          %287 = sbr.rel (%p285) target = $region40
        $region39: #{_lambda_.1} parent=11 // pred_region
          _
        $region40: #{_lambda_.1} parent=11 // pred_fallthru
          _
        // Predicated region
        $region41: #{_lambda_.1} parent=11 // pred_check
          %p288 = pneg %p224
        $region42: #{_lambda_.1} parent=11 // pred_check_branch
          %290 = sbr.rel (%p288) target = $region44
        $region43: #{_lambda_.1} parent=11 // pred_region
          _
        $region44: #{_lambda_.1} parent=11 // pred_fallthru
          _
      $region12: #{_lambda_.1} parent=5 // pred_fallthru
        _
      %p291 = scmp.lt.s32.totalorder %s18, 2
      // Predicated region
      $region45: #{_lambda_.1} parent=5 // pred_check
        %p292 = pneg %p291
      $region46: #{_lambda_.1} parent=5 // pred_check_branch
        %294 = sbr.rel (%p292) target = $region48
      $region47: #{_lambda_.1} parent=5 // pred_region
        // Predicated region
        $region49: #{_lambda_.1} parent=47 // pred_check
          %p295 = pneg %p50
        $region50: #{_lambda_.1} parent=47 // pred_check_branch
          %297 = sbr.rel (%p295) target = $region52
        $region51: #{_lambda_.1} parent=47 // pred_region
          %p298 = scmp.lt.s32.totalorder %s25, 1
          %s299 = scalar_select %p298, %s25, 1
          %s300 = smul.addr %s299, 8
          %s301 = smul.addr %s300, 4
          %s302 = scalar_lea.vmem %s0, %s301
        $region52: #{_lambda_.1} parent=47 // pred_fallthru
          _
      $region48: #{_lambda_.1} parent=5 // pred_fallthru
        _
      %p303 = scmp.le.s32.totalorder 1, %s18
      %p304 = scmp.lt.s32.totalorder %s18, 3
      %p305 = pnand %p303, %p304
      %p306 = pneg %p305
      // Predicated region
      $region53: #{_lambda_.1} parent=5 // pred_check
        _
      $region54: #{_lambda_.1} parent=5 // pred_check_branch
        %308 = sbr.rel (%p305) target = $region56
      $region55: #{_lambda_.1} parent=5 // pred_region
        %s309 = ssub.s32 %s18, 1
        %p310 = scmp.lt.s32.totalorder %s27, 1
        %s311 = scalar_select %p310, %s27, 1
        %s312 = smul.addr %s311, 8
        %s313 = smul.addr %s312, 4
        %s314 = scalar_lea.vmem %s0, %s313
        %p315 = pneg %p56
        %p316 = pneg %p53
        %p317 = pneg %p77
        %p318 = pneg %p74
        %p319 = pneg %p98
        %p320 = pneg %p95
        %p321 = pneg %p119
        %p322 = pneg %p116
        %p323 = pneg %p140
        %p324 = pneg %p137
        %p325 = pneg %p161
        %p326 = pneg %p158
        %p327 = pneg %p182
        %p328 = pneg %p179
        %p329 = pneg %p203
        %p330 = pneg %p200
        %p331 = pneg %p224
        %p332 = pneg %p221
        %p333 = pneg %p252
        %p334 = pneg %p249
        %s335 = sand.u32 %s239, 1
        %s336 = scalar_lea.sflag [#allocation5], %s335
        %s337 = sand.u32 %s239, 1
        %s338 = smul.addr %s337, 64
        %s339 = scalar_lea.vmem [#allocation4], %s338
        %p340 = scmp.lt.s32.totalorder %s27, 1
        %s341 = scalar_select %p340, %s27, 1
        %s342 = smul.addr %s341, 8
        %s343 = smul.addr %s342, 4
        %s344 = scalar_lea.vmem %s0, %s343
        %s345 = smul.u32 8, %s28
        %s347 = smul.u32 %s28, 8
        %v348 = vld [vmem:[%s1] sm:$0xf]
        %v349 = vld [vmem:[%s2] sm:$0x1]
        %vm350 = vcmask 57344
        %vm351 = vsmask.f32 256
        %vm352 = vmand %vm350, %vm351
        %v353 = vld [vmem:[#allocation2] sm:$0x1]
        %v354 = vsel %vm352, 0, %v353
        %355 = vst [vmem:[#allocation2] sm:$0x1] %v354
        %v356 = vld [vmem:[#allocation2 + $0x8] sm:$0x1]
        %v357 = vsel %vm352, 0, %v356
        %358 = vst [vmem:[#allocation2 + $0x8] sm:$0x1] %v357
        %v359 = vld [vmem:[#allocation2 + $0x10] sm:$0x1]
        %v360 = vsel %vm352, 0, %v359
        %361 = vst [vmem:[#allocation2 + $0x10] sm:$0x1] %v360
        %v362 = vld [vmem:[#allocation2 + $0x18] sm:$0x1]
        %v363 = vsel %vm352, 0, %v362
        %364 = vst [vmem:[#allocation2 + $0x18] sm:$0x1] %v363
        %v365 = vld [vmem:[#allocation2 + $0x20] sm:$0x1]
        %v366 = vsel %vm352, 0, %v365
        %367 = vst [vmem:[#allocation2 + $0x20] sm:$0x1] %v366
        %v368 = vld [vmem:[#allocation2 + $0x28] sm:$0x1]
        %v369 = vsel %vm352, 0, %v368
        %370 = vst [vmem:[#allocation2 + $0x28] sm:$0x1] %v369
        %v371 = vld [vmem:[#allocation2 + $0x30] sm:$0x1]
        %v372 = vsel %vm352, 0, %v371
        %373 = vst [vmem:[#allocation2 + $0x30] sm:$0x1] %v372
        %v374 = vld [vmem:[#allocation2 + $0x38] sm:$0x1]
        %v375 = vsel %vm352, 0, %v374
        %376 = vst [vmem:[#allocation2 + $0x38] sm:$0x1] %v375
        %v377 = vld [vmem:[#allocation2 + $0x40] sm:$0x1]
        %v378 = vsel %vm352, 0, %v377
        %379 = vst [vmem:[#allocation2 + $0x40] sm:$0x1] %v378
        %v380 = vld [vmem:[#allocation2 + $0x48] sm:$0x1]
        %v381 = vsel %vm352, 0, %v380
        %382 = vst [vmem:[#allocation2 + $0x48] sm:$0x1] %v381
        %vm383 = vsmask.f32 7938
        %vm384 = vmand %vm350, %vm383
        %v385 = vld [vmem:[#allocation2 + $0x4] sm:$0x1]
        %v386 = vsel %vm384, 0, %v385
        %387 = vst [vmem:[#allocation2 + $0x4] sm:$0x1] %v386
        %v388 = vld [vmem:[#allocation2 + $0xc] sm:$0x1]
        %v389 = vsel %vm384, 0, %v388
        %390 = vst [vmem:[#allocation2 + $0xc] sm:$0x1] %v389
        %v391 = vld [vmem:[#allocation2 + $0x14] sm:$0x1]
        %v392 = vsel %vm384, 0, %v391
        %393 = vst [vmem:[#allocation2 + $0x14] sm:$0x1] %v392
        %v394 = vld [vmem:[#allocation2 + $0x1c] sm:$0x1]
        %v395 = vsel %vm384, 0, %v394
        %396 = vst [vmem:[#allocation2 + $0x1c] sm:$0x1] %v395
        %v397 = vld [vmem:[#allocation2 + $0x24] sm:$0x1]
        %v398 = vsel %vm384, 0, %v397
        %399 = vst [vmem:[#allocation2 + $0x24] sm:$0x1] %v398
        %v400 = vld [vmem:[#allocation2 + $0x2c] sm:$0x1]
        %v401 = vsel %vm384, 0, %v400
        %402 = vst [vmem:[#allocation2 + $0x2c] sm:$0x1] %v401
        %v403 = vld [vmem:[#allocation2 + $0x34] sm:$0x1]
        %v404 = vsel %vm384, 0, %v403
        %405 = vst [vmem:[#allocation2 + $0x34] sm:$0x1] %v404
        %v406 = vld [vmem:[#allocation2 + $0x3c] sm:$0x1]
        %v407 = vsel %vm384, 0, %v406
        %408 = vst [vmem:[#allocation2 + $0x3c] sm:$0x1] %v407
        %v409 = vld [vmem:[#allocation2 + $0x44] sm:$0x1]
        %v410 = vsel %vm384, 0, %v409
        %411 = vst [vmem:[#allocation2 + $0x44] sm:$0x1] %v410
        %v412 = vld [vmem:[#allocation2 + $0x4c] sm:$0x1]
        %v413 = vsel %vm384, 0, %v412
        %414 = vst [vmem:[#allocation2 + $0x4c] sm:$0x1] %v413
        %vm415 = vcmask 60416
        %vm416 = vmand %vm415, %vm383
        %v417 = vld [vmem:[#allocation2] sm:$0xf]
        %v418 = vsel %vm416, 0, %v417
        %419 = vst [vmem:[#allocation2] sm:$0xf] %v418
        %v420 = vld [vmem:[#allocation2 + $0x4] sm:$0x1]
        %v421 = vsel %vm352, 0, %v420
        %422 = vst [vmem:[#allocation2 + $0x4] sm:$0x1] %v421
        %s423 = scalar_lea.vmem [#allocation2], 72
        %v424 = vld [vmem:[%s423] sm:$0xf]
        %v425 = vsel %vm416, 0, %v424
        %426 = vst [vmem:[%s423] sm:$0xf] %v425
        %v427 = vld [vmem:[%s423 + $0x4] sm:$0x1]
        %v428 = vsel %vm352, 0, %v427
        %429 = vst [vmem:[%s423 + $0x4] sm:$0x1] %v428
        %s430 = smul.addr %s347, 4
        %s431 = scalar_lea.vmem %s344, %s430
        %v432 = vld [vmem:[%s431] sm:$0xf]
        %v433 = vld [vmem:[%s431 + $0x4] sm:$0xf]
        %v434 = vld [vmem:[%s431 + $0x8] sm:$0xf]
        %v435 = vld [vmem:[%s431 + $0xc] sm:$0xf]
        %v436 = vld [vmem:[%s431 + $0x10] sm:$0xf]
        %v437 = vld [vmem:[%s431 + $0x14] sm:$0xf]
        %v438 = vld [vmem:[%s431 + $0x18] sm:$0xf]
        %v439 = vld [vmem:[%s431 + $0x1c] sm:$0xf]
        %v441 = vlaneseq
        %v442 = vshrl.u32 %v441, 7
        %v443 = vsub.s32 0, %v442
        %v444 = vrot.slane %v349, %v443
        %v454 = vunpack.c.l.b16 %v432
        %v455 = vunpack.c.l.b16 %v433
        %v456 = vunpack.c.l.b16 %v434
        %v457 = vunpack.c.l.b16 %v435
        %v458 = vunpack.c.l.b16 %v436
        %v459 = vunpack.c.l.b16 %v437
        %v460 = vunpack.c.l.b16 %v438
        %v461 = vunpack.c.l.b16 %v439
        %v462 = vpack.c.b16 %v455, %v454
        %v463 = vpack.c.b16 %v457, %v456
        %v464 = vpack.c.b16 %v459, %v458
        %v465 = vpack.c.b16 %v461, %v460
        %vm466 = vcmask 64512
        %v468 = vsel %vm466, %v462, 0
        %v471 = vsel %vm466, %v463, 0
        %v474 = vsel %vm466, %v464, 0
        %v477 = vsel %vm466, %v465, 0
        %vm479 = vcmask 1043456
        %v481 = vsel %vm479, %v348, 0
        %483 = vmatprep.subr.bf16.mxu0 0
        %484 = vmatpush1.bf16.msra.mxu0 %v481
        %485 = vmatprep.subr.bf16.mxu0 0
        %486 = vmatpush1.bf16.msra.mxu0 0
        %487 = vmatprep.subr.bf16.mxu0 0
        %488 = vmatpush1.bf16.msra.mxu0 0
        %489 = vmatprep.subr.bf16.mxu0 0
        %490 = vmatpush1.bf16.msra.mxu0 0
        %491 = vmatprep.subr.bf16.mxu0 0
        %492 = vmatpush1.bf16.msra.mxu0 0
        %493 = vmatprep.subr.bf16.mxu0 0
        %494 = vmatpush1.bf16.msra.mxu0 0
        %495 = vmatprep.subr.bf16.mxu0 0
        %496 = vmatpush1.bf16.msra.mxu0 0
        %497 = vmatprep.subr.bf16.mxu0 0
        %498 = vmatpush1.bf16.msra.mxu0 0
        %499 = vmatprep.subr.bf16.mxu0 0
        %500 = vmatpush1.bf16.msra.mxu0 0
        %501 = vmatprep.subr.bf16.mxu0 0
        %502 = vmatpush1.bf16.msra.mxu0 0
        %503 = vmatprep.subr.bf16.mxu0 0
        %504 = vmatpush1.bf16.msra.mxu0 0
        %505 = vmatprep.subr.bf16.mxu0 0
        %506 = vmatpush1.bf16.msra.mxu0 0
        %507 = vmatprep.subr.bf16.mxu0 0
        %508 = vmatpush1.bf16.msra.mxu0 0
        %509 = vmatprep.subr.bf16.mxu0 0
        %510 = vmatpush1.bf16.msra.mxu0 0
        %511 = vmatprep.subr.bf16.mxu0 0
        %512 = vmatpush1.bf16.msra.mxu0 0
        %513 = vmatprep.subr.bf16.mxu0 0
        %514 = vmatpush1.bf16.msra.mxu0 0
        %515 = vmatprep.mubr.bf16.mxu0 0
        %516 = vmatmul.mubr.bf16.gmra.mrb[0].mxu0 %v468
        %v517 = vpop.f32.mrb[0].mxu0
        %v518 = vadd.f32 %v444, %v517
        %v519 = vpop.f32.mrb[0].mxu0
        %v520 = vpop.f32.mrb[0].mxu0
        %v521 = vadd.f32 %v444, %v520
        %v522 = vpop.f32.mrb[0].mxu0
        %523 = vmatprep.mubr.bf16.mxu0 0
        %524 = vmatmul.mubr.bf16.gmra.mrb[0].mxu0 %v471
        %v525 = vpop.f32.mrb[0].mxu0
        %v526 = vadd.f32 %v444, %v525
        %v527 = vpop.f32.mrb[0].mxu0
        %v528 = vpop.f32.mrb[0].mxu0
        %v529 = vadd.f32 %v444, %v528
        %v530 = vpop.f32.mrb[0].mxu0
        %531 = vmatprep.mubr.bf16.mxu0 0
        %532 = vmatmul.mubr.bf16.gmra.mrb[0].mxu0 %v474
        %v533 = vpop.f32.mrb[0].mxu0
        %v534 = vadd.f32 %v444, %v533
        %v535 = vpop.f32.mrb[0].mxu0
        %v536 = vpop.f32.mrb[0].mxu0
        %v537 = vadd.f32 %v444, %v536
        %v538 = vpop.f32.mrb[0].mxu0
        %539 = vmatprep.mubr.bf16.mxu0 0
        %540 = vmatmul.mubr.bf16.gmra.mrb[0].mxu0 %v477
        %v541 = vpop.f32.mrb[0].mxu0
        %v542 = vadd.f32 %v444, %v541
        %v543 = vpop.f32.mrb[0].mxu0
        %v544 = vpop.f32.mrb[0].mxu0
        %v545 = vadd.f32 %v444, %v544
        %v546 = vpop.f32.mrb[0].mxu0
        %547 = vdwg.mxu0
        %v548 = vmax.f32 %v518, 0.0
        %v549 = vmax.f32 %v521, 0.0
        %v550 = vmax.f32 %v526, 0.0
        %v551 = vmax.f32 %v529, 0.0
        %v552 = vmax.f32 %v534, 0.0
        %v553 = vmax.f32 %v537, 0.0
        %v554 = vmax.f32 %v542, 0.0
        %v555 = vmax.f32 %v545, 0.0
        %v556 = vpack.c.bf16 %v549, %v548
        %v557 = vpack.c.bf16 %v551, %v550
        %v558 = vpack.c.bf16 %v553, %v552
        %v559 = vpack.c.bf16 %v555, %v554
        %v564 = vunpack.c.l.b16 %v556
        %v565 = vunpack.c.h.b16 %v556
        %v566 = vunpack.c.l.b16 %v557
        %v567 = vunpack.c.h.b16 %v557
        %v568 = vunpack.c.l.b16 %v558
        %v569 = vunpack.c.h.b16 %v558
        %v570 = vunpack.c.l.b16 %v559
        %v571 = vunpack.c.h.b16 %v559
        %v572 = vpack.c.b16 %v564, %v564
        %v573 = vpack.c.b16 %v565, %v565
        %v574 = vpack.c.b16 %v566, %v566
        %v575 = vpack.c.b16 %v567, %v567
        %v576 = vpack.c.b16 %v568, %v568
        %v577 = vpack.c.b16 %v569, %v569
        %v578 = vpack.c.b16 %v570, %v570
        %v579 = vpack.c.b16 %v571, %v571
        %v581 = vshrl.u32 %v572, 16
        %v583 = vrot.slane %v581, 7
        %v584 = vshll.u32 %v572, 16
        %v586 = vor.u32 %v583, %v584
        %v587 = vrot.slane %v583, 4
        %v589 = vshrl.u32 %v573, 16
        %v591 = vrot.slane %v589, 7
        %v592 = vshll.u32 %v573, 16
        %v594 = vor.u32 %v591, %v592
        %v595 = vrot.slane %v591, 4
        %v597 = vshrl.u32 %v574, 16
        %v599 = vrot.slane %v597, 7
        %v600 = vshll.u32 %v574, 16
        %v602 = vor.u32 %v599, %v600
        %v603 = vrot.slane %v599, 4
        %v605 = vshrl.u32 %v575, 16
        %v607 = vrot.slane %v605, 7
        %v608 = vshll.u32 %v575, 16
        %v610 = vor.u32 %v607, %v608
        %v611 = vrot.slane %v607, 4
        %v613 = vshrl.u32 %v576, 16
        %v615 = vrot.slane %v613, 7
        %v616 = vshll.u32 %v576, 16
        %v618 = vor.u32 %v615, %v616
        %v619 = vrot.slane %v615, 4
        %v621 = vshrl.u32 %v577, 16
        %v623 = vrot.slane %v621, 7
        %v624 = vshll.u32 %v577, 16
        %v626 = vor.u32 %v623, %v624
        %v627 = vrot.slane %v623, 4
        %v629 = vshrl.u32 %v578, 16
        %v631 = vrot.slane %v629, 7
        %v632 = vshll.u32 %v578, 16
        %v634 = vor.u32 %v631, %v632
        %v635 = vrot.slane %v631, 4
        %v637 = vshrl.u32 %v579, 16
        %v639 = vrot.slane %v637, 7
        %v640 = vshll.u32 %v579, 16
        %v642 = vor.u32 %v639, %v640
        %v643 = vrot.slane %v639, 4
        %s660 = scalar_lea.vmem [#allocation2], 8
        %v661 = vld [vmem:[%s660] sm:$0xf]
        %v662 = vsel %vm416, %v586, %v661
        %663 = vst [vmem:[%s660] sm:$0xf] %v662
        %v664 = vld [vmem:[%s660 + $0x4] sm:$0x1]
        %v665 = vsel %vm352, %v587, %v664
        %666 = vst [vmem:[%s660 + $0x4] sm:$0x1] %v665
        %v667 = vld [vmem:[%s660 + $0x8] sm:$0xf]
        %v668 = vsel %vm416, %v594, %v667
        %669 = vst [vmem:[%s660 + $0x8] sm:$0xf] %v668
        %v670 = vld [vmem:[%s660 + $0xc] sm:$0x1]
        %v671 = vsel %vm352, %v595, %v670
        %672 = vst [vmem:[%s660 + $0xc] sm:$0x1] %v671
        %v673 = vld [vmem:[%s660 + $0x10] sm:$0xf]
        %v674 = vsel %vm416, %v602, %v673
        %675 = vst [vmem:[%s660 + $0x10] sm:$0xf] %v674
        %v676 = vld [vmem:[%s660 + $0x14] sm:$0x1]
        %v677 = vsel %vm352, %v603, %v676
        %678 = vst [vmem:[%s660 + $0x14] sm:$0x1] %v677
        %v679 = vld [vmem:[%s660 + $0x18] sm:$0xf]
        %v680 = vsel %vm416, %v610, %v679
        %681 = vst [vmem:[%s660 + $0x18] sm:$0xf] %v680
        %v682 = vld [vmem:[%s660 + $0x1c] sm:$0x1]
        %v683 = vsel %vm352, %v611, %v682
        %684 = vst [vmem:[%s660 + $0x1c] sm:$0x1] %v683
        %v685 = vld [vmem:[%s660 + $0x20] sm:$0xf]
        %v686 = vsel %vm416, %v618, %v685
        %687 = vst [vmem:[%s660 + $0x20] sm:$0xf] %v686
        %v688 = vld [vmem:[%s660 + $0x24] sm:$0x1]
        %v689 = vsel %vm352, %v619, %v688
        %690 = vst [vmem:[%s660 + $0x24] sm:$0x1] %v689
        %v691 = vld [vmem:[%s660 + $0x28] sm:$0xf]
        %v692 = vsel %vm416, %v626, %v691
        %693 = vst [vmem:[%s660 + $0x28] sm:$0xf] %v692
        %v694 = vld [vmem:[%s660 + $0x2c] sm:$0x1]
        %v695 = vsel %vm352, %v627, %v694
        %696 = vst [vmem:[%s660 + $0x2c] sm:$0x1] %v695
        %v697 = vld [vmem:[%s660 + $0x30] sm:$0xf]
        %v698 = vsel %vm416, %v634, %v697
        %699 = vst [vmem:[%s660 + $0x30] sm:$0xf] %v698
        %v700 = vld [vmem:[%s660 + $0x34] sm:$0x1]
        %v701 = vsel %vm352, %v635, %v700
        %702 = vst [vmem:[%s660 + $0x34] sm:$0x1] %v701
        %v703 = vld [vmem:[%s660 + $0x38] sm:$0xf]
        %v704 = vsel %vm416, %v642, %v703
        %705 = vst [vmem:[%s660 + $0x38] sm:$0xf] %v704
        %v706 = vld [vmem:[%s660 + $0x3c] sm:$0x1]
        %v707 = vsel %vm352, %v643, %v706
        %708 = vst [vmem:[%s660 + $0x3c] sm:$0x1] %v707
        %p709 = scmp.gt.s32.totalorder %s347, 0
        // Predicated region
        $region57: #{_lambda_.1} parent=55 // pred_check
          %p710 = pneg %p709
        $region58: #{_lambda_.1} parent=55 // pred_check_branch
          %712 = sbr.rel (%p710) target = $region60
        $region59: #{_lambda_.1} parent=55 // pred_region
          %s713 = ssub.s32 %s347, 1
          %s714 = smul.addr %s713, 4
          %s715 = scalar_lea.vmem %s344, %s714
          %v716 = vld [vmem:[%s715] sm:$0xf]
          %v718 = vsel %vm466, %v716, 0
          %720 = vmatprep.subr.bf16.mxu0 0
          %721 = vmatpush1.bf16.msra.mxu0 %v481
          %722 = vmatprep.subr.bf16.mxu0 0
          %723 = vmatpush1.bf16.msra.mxu0 0
          %724 = vmatprep.subr.bf16.mxu0 0
          %725 = vmatpush1.bf16.msra.mxu0 0
          %726 = vmatprep.subr.bf16.mxu0 0
          %727 = vmatpush1.bf16.msra.mxu0 0
          %728 = vmatprep.subr.bf16.mxu0 0
          %729 = vmatpush1.bf16.msra.mxu0 0
          %730 = vmatprep.subr.bf16.mxu0 0
          %731 = vmatpush1.bf16.msra.mxu0 0
          %732 = vmatprep.subr.bf16.mxu0 0
          %733 = vmatpush1.bf16.msra.mxu0 0
          %734 = vmatprep.subr.bf16.mxu0 0
          %735 = vmatpush1.bf16.msra.mxu0 0
          %736 = vmatprep.subr.bf16.mxu0 0
          %737 = vmatpush1.bf16.msra.mxu0 0
          %738 = vmatprep.subr.bf16.mxu0 0
          %739 = vmatpush1.bf16.msra.mxu0 0
          %740 = vmatprep.subr.bf16.mxu0 0
          %741 = vmatpush1.bf16.msra.mxu0 0
          %742 = vmatprep.subr.bf16.mxu0 0
          %743 = vmatpush1.bf16.msra.mxu0 0
          %744 = vmatprep.subr.bf16.mxu0 0
          %745 = vmatpush1.bf16.msra.mxu0 0
          %746 = vmatprep.subr.bf16.mxu0 0
          %747 = vmatpush1.bf16.msra.mxu0 0
          %748 = vmatprep.subr.bf16.mxu0 0
          %749 = vmatpush1.bf16.msra.mxu0 0
          %750 = vmatprep.subr.bf16.mxu0 0
          %751 = vmatpush1.bf16.msra.mxu0 0
          %752 = vmatprep.mubr.bf16.mxu0 0
          %753 = vmatmul.mubr.bf16.gmra.mrb[0].mxu0 %v718
          %v754 = vpop.f32.mrb[0].mxu0
          %v755 = vadd.f32 %v444, %v754
          %v756 = vpop.f32.mrb[0].mxu0
          %v757 = vpop.f32.mrb[0].mxu0
          %v758 = vpop.f32.mrb[0].mxu0
          %759 = vdwg.mxu0
          %v760 = vmax.f32 %v755, 0.0
          %v761 = vpack.c.bf16 %v760, %v760
          %v763 = vunpack.c.l.b16 %v761
          %v764 = vpack.c.b16 %v763, %v763
          %v766 = vshrl.u32 %v764, 16
          %v768 = vrot.slane %v766, 7
          %v769 = vshll.u32 %v764, 16
          %v771 = vor.u32 %v768, %v769
          %v772 = vrot.slane %v768, 4
          %v775 = vld [vmem:[#allocation2] sm:$0xf]
          %v776 = vsel %vm416, %v771, %v775
          %777 = vst [vmem:[#allocation2] sm:$0xf] %v776
          %v778 = vld [vmem:[#allocation2 + $0x4] sm:$0x1]
          %v779 = vsel %vm352, %v772, %v778
          %780 = vst [vmem:[#allocation2 + $0x4] sm:$0x1] %v779
        $region60: #{_lambda_.1} parent=55 // pred_fallthru
          _
        %s781 = sadd.s32 %s347, 8
        %p782 = scmp.lt.s32.totalorder %s781, 8
        // Predicated region
        $region61: #{_lambda_.1} parent=55 // pred_check
          %p783 = pneg %p782
        $region62: #{_lambda_.1} parent=55 // pred_check_branch
          %785 = sbr.rel (%p783) target = $region64
        $region63: #{_lambda_.1} parent=55 // pred_region
          %s786 = smul.addr %s781, 4
          %s787 = scalar_lea.vmem %s344, %s786
          %v788 = vld [vmem:[%s787] sm:$0xf]
          %v790 = vsel %vm466, %v788, 0
          %792 = vmatprep.subr.bf16.mxu0 0
          %793 = vmatpush1.bf16.msra.mxu0 %v481
          %794 = vmatprep.subr.bf16.mxu0 0
          %795 = vmatpush1.bf16.msra.mxu0 0
          %796 = vmatprep.subr.bf16.mxu0 0
          %797 = vmatpush1.bf16.msra.mxu0 0
          %798 = vmatprep.subr.bf16.mxu0 0
          %799 = vmatpush1.bf16.msra.mxu0 0
          %800 = vmatprep.subr.bf16.mxu0 0
          %801 = vmatpush1.bf16.msra.mxu0 0
          %802 = vmatprep.subr.bf16.mxu0 0
          %803 = vmatpush1.bf16.msra.mxu0 0
          %804 = vmatprep.subr.bf16.mxu0 0
          %805 = vmatpush1.bf16.msra.mxu0 0
          %806 = vmatprep.subr.bf16.mxu0 0
          %807 = vmatpush1.bf16.msra.mxu0 0
          %808 = vmatprep.subr.bf16.mxu0 0
          %809 = vmatpush1.bf16.msra.mxu0 0
          %810 = vmatprep.subr.bf16.mxu0 0
          %811 = vmatpush1.bf16.msra.mxu0 0
          %812 = vmatprep.subr.bf16.mxu0 0
          %813 = vmatpush1.bf16.msra.mxu0 0
          %814 = vmatprep.subr.bf16.mxu0 0
          %815 = vmatpush1.bf16.msra.mxu0 0
          %816 = vmatprep.subr.bf16.mxu0 0
          %817 = vmatpush1.bf16.msra.mxu0 0
          %818 = vmatprep.subr.bf16.mxu0 0
          %819 = vmatpush1.bf16.msra.mxu0 0
          %820 = vmatprep.subr.bf16.mxu0 0
          %821 = vmatpush1.bf16.msra.mxu0 0
          %822 = vmatprep.subr.bf16.mxu0 0
          %823 = vmatpush1.bf16.msra.mxu0 0
          %824 = vmatprep.mubr.bf16.mxu0 0
          %825 = vmatmul.mubr.bf16.gmra.mrb[0].mxu0 %v790
          %v826 = vpop.f32.mrb[0].mxu0
          %v827 = vadd.f32 %v444, %v826
          %v828 = vpop.f32.mrb[0].mxu0
          %v829 = vpop.f32.mrb[0].mxu0
          %v830 = vpop.f32.mrb[0].mxu0
          %831 = vdwg.mxu0
          %v832 = vmax.f32 %v827, 0.0
          %v833 = vpack.c.bf16 %v832, %v832
          %v835 = vunpack.c.l.b16 %v833
          %v836 = vpack.c.b16 %v835, %v835
          %v838 = vshrl.u32 %v836, 16
          %v840 = vrot.slane %v838, 7
          %v841 = vshll.u32 %v836, 16
          %v843 = vor.u32 %v840, %v841
          %v844 = vrot.slane %v840, 4
          %v847 = vld [vmem:[%s423] sm:$0xf]
          %v848 = vsel %vm416, %v843, %v847
          %849 = vst [vmem:[%s423] sm:$0xf] %v848
          %v850 = vld [vmem:[%s423 + $0x4] sm:$0x1]
          %v851 = vsel %vm352, %v844, %v850
          %852 = vst [vmem:[%s423 + $0x4] sm:$0x1] %v851
        $region64: #{_lambda_.1} parent=55 // pred_fallthru
          _
        %v853 = vld [vmem:[#allocation2] sm:$0xf]
        %v854 = vld [vmem:[#allocation2 + $0x8] sm:$0xf]
        %v855 = vld [vmem:[#allocation2 + $0x10] sm:$0xf]
        %v856 = vld [vmem:[#allocation2 + $0x18] sm:$0xf]
        %v857 = vld [vmem:[#allocation2 + $0x20] sm:$0xf]
        %v858 = vld [vmem:[#allocation2 + $0x28] sm:$0xf]
        %v859 = vld [vmem:[#allocation2 + $0x30] sm:$0xf]
        %v860 = vld [vmem:[#allocation2 + $0x38] sm:$0xf]
        %v869 = vunpack.c.l.b16 %v853
        %v870 = vunpack.c.l.b16 %v854
        %v871 = vunpack.c.l.b16 %v855
        %v872 = vunpack.c.l.b16 %v856
        %v873 = vunpack.c.l.b16 %v857
        %v874 = vunpack.c.l.b16 %v858
        %v875 = vunpack.c.l.b16 %v859
        %v876 = vunpack.c.l.b16 %v860
        %v877 = vpack.c.b16 %v870, %v869
        %v878 = vpack.c.b16 %v872, %v871
        %v879 = vpack.c.b16 %v874, %v873
        %v880 = vpack.c.b16 %v876, %v875
        %885 = vst.msk [vmem:[#allocation3] sm:$0xff] %vm466, %v877
        %886 = vst.msk [vmem:[#allocation3 + $0x8] sm:$0xff] %vm466, %v878
        %887 = vst.msk [vmem:[#allocation3 + $0x10] sm:$0xff] %vm466, %v879
        %888 = vst.msk [vmem:[#allocation3 + $0x18] sm:$0xff] %vm466, %v880
        %v889 = vld [vmem:[#allocation2] sm:$0xf]
        %v890 = vld [vmem:[#allocation2 + $0x4] sm:$0x1]
        %v891 = vld [vmem:[#allocation2 + $0x8] sm:$0xf]
        %v892 = vld [vmem:[#allocation2 + $0xc] sm:$0x1]
        %v893 = vld [vmem:[#allocation2 + $0x10] sm:$0xf]
        %v894 = vld [vmem:[#allocation2 + $0x14] sm:$0x1]
        %v895 = vld [vmem:[#allocation2 + $0x18] sm:$0xf]
        %v896 = vld [vmem:[#allocation2 + $0x1c] sm:$0x1]
        %v897 = vld [vmem:[#allocation2 + $0x20] sm:$0xf]
        %v898 = vld [vmem:[#allocation2 + $0x24] sm:$0x1]
        %v899 = vld [vmem:[#allocation2 + $0x28] sm:$0xf]
        %v900 = vld [vmem:[#allocation2 + $0x2c] sm:$0x1]
        %v901 = vld [vmem:[#allocation2 + $0x30] sm:$0xf]
        %v902 = vld [vmem:[#allocation2 + $0x34] sm:$0x1]
        %v903 = vld [vmem:[#allocation2 + $0x38] sm:$0xf]
        %v904 = vld [vmem:[#allocation2 + $0x3c] sm:$0x1]
        %vm905 = vsmask.f32 3328
        %vm906 = vsmask.f32 7440
        %vm907 = vmor %vm905, %vm906
        %v909 = vshrl.u32 %v889, 16
        %v911 = vrot.slane %v909, 4
        %v912 = vshll.u32 %v889, 16
        %v914 = vrot.slane %v912, 5
        %v915 = vor.u32 %v911, %v914
        %v916 = vrot.slane %v915, 4
        %v918 = vshll.u32 %v890, 16
        %v920 = vrot.slane %v918, 5
        %v921 = vsel %vm907, %v916, %v920
        %v923 = vshrl.u32 %v891, 16
        %v925 = vrot.slane %v923, 4
        %v926 = vshll.u32 %v891, 16
        %v928 = vrot.slane %v926, 5
        %v929 = vor.u32 %v925, %v928
        %v930 = vrot.slane %v929, 4
        %v932 = vshll.u32 %v892, 16
        %v934 = vrot.slane %v932, 5
        %v935 = vsel %vm907, %v930, %v934
        %v937 = vshrl.u32 %v893, 16
        %v939 = vrot.slane %v937, 4
        %v940 = vshll.u32 %v893, 16
        %v942 = vrot.slane %v940, 5
        %v943 = vor.u32 %v939, %v942
        %v944 = vrot.slane %v943, 4
        %v946 = vshll.u32 %v894, 16
        %v948 = vrot.slane %v946, 5
        %v949 = vsel %vm907, %v944, %v948
        %v951 = vshrl.u32 %v895, 16
        %v953 = vrot.slane %v951, 4
        %v954 = vshll.u32 %v895, 16
        %v956 = vrot.slane %v954, 5
        %v957 = vor.u32 %v953, %v956
        %v958 = vrot.slane %v957, 4
        %v960 = vshll.u32 %v896, 16
        %v962 = vrot.slane %v960, 5
        %v963 = vsel %vm907, %v958, %v962
        %v965 = vshrl.u32 %v897, 16
        %v967 = vrot.slane %v965, 4
        %v968 = vshll.u32 %v897, 16
        %v970 = vrot.slane %v968, 5
        %v971 = vor.u32 %v967, %v970
        %v972 = vrot.slane %v971, 4
        %v974 = vshll.u32 %v898, 16
        %v976 = vrot.slane %v974, 5
        %v977 = vsel %vm907, %v972, %v976
        %v979 = vshrl.u32 %v899, 16
        %v981 = vrot.slane %v979, 4
        %v982 = vshll.u32 %v899, 16
        %v984 = vrot.slane %v982, 5
        %v985 = vor.u32 %v981, %v984
        %v986 = vrot.slane %v985, 4
        %v988 = vshll.u32 %v900, 16
        %v990 = vrot.slane %v988, 5
        %v991 = vsel %vm907, %v986, %v990
        %v993 = vshrl.u32 %v901, 16
        %v995 = vrot.slane %v993, 4
        %v996 = vshll.u32 %v901, 16
        %v998 = vrot.slane %v996, 5
        %v999 = vor.u32 %v995, %v998
        %v1000 = vrot.slane %v999, 4
        %v1002 = vshll.u32 %v902, 16
        %v1004 = vrot.slane %v1002, 5
        %v1005 = vsel %vm907, %v1000, %v1004
        %v1007 = vshrl.u32 %v903, 16
        %v1009 = vrot.slane %v1007, 4
        %v1010 = vshll.u32 %v903, 16
        %v1012 = vrot.slane %v1010, 5
        %v1013 = vor.u32 %v1009, %v1012
        %v1014 = vrot.slane %v1013, 4
        %v1016 = vshll.u32 %v904, 16
        %v1018 = vrot.slane %v1016, 5
        %v1019 = vsel %vm907, %v1014, %v1018
        %v1020 = vunpack.c.l.b16 %v921
        %v1021 = vunpack.c.l.b16 %v935
        %v1022 = vunpack.c.l.b16 %v949
        %v1023 = vunpack.c.l.b16 %v963
        %v1024 = vunpack.c.l.b16 %v977
        %v1025 = vunpack.c.l.b16 %v991
        %v1026 = vunpack.c.l.b16 %v1005
        %v1027 = vunpack.c.l.b16 %v1019
        %v1028 = vpack.c.b16 %v1021, %v1020
        %v1029 = vpack.c.b16 %v1023, %v1022
        %v1030 = vpack.c.b16 %v1025, %v1024
        %v1031 = vpack.c.b16 %v1027, %v1026
        %1032 = vrot.lane.b32.xlu0 %v1028, 8
        %v1033 = vpop.permute.xlu0 %1032
        %1034 = vrot.lane.b32.xlu0 %v1029, 8
        %v1035 = vpop.permute.xlu0 %1034
        %1036 = vrot.lane.b32.xlu0 %v1030, 8
        %v1037 = vpop.permute.xlu0 %1036
        %1038 = vrot.lane.b32.xlu0 %v1031, 8
        %v1039 = vpop.permute.xlu0 %1038
        %vm1044 = vcmask 130112
        %1045 = vst.msk [vmem:[#allocation3] sm:$0xff] %vm1044, %v1033
        %1046 = vst.msk [vmem:[#allocation3 + $0x8] sm:$0xff] %vm1044, %v1035
        %1047 = vst.msk [vmem:[#allocation3 + $0x10] sm:$0xff] %vm1044, %v1037
        %1048 = vst.msk [vmem:[#allocation3 + $0x18] sm:$0xff] %vm1044, %v1039
        %v1049 = vld [vmem:[#allocation2] sm:$0xe]
        %v1050 = vld [vmem:[#allocation2 + $0x4] sm:$0x1]
        %v1051 = vld [vmem:[#allocation2 + $0x8] sm:$0xe]
        %v1052 = vld [vmem:[#allocation2 + $0xc] sm:$0x1]
        %v1053 = vld [vmem:[#allocation2 + $0x10] sm:$0xe]
        %v1054 = vld [vmem:[#allocation2 + $0x14] sm:$0x1]
        %v1055 = vld [vmem:[#allocation2 + $0x18] sm:$0xe]
        %v1056 = vld [vmem:[#allocation2 + $0x1c] sm:$0x1]
        %v1057 = vld [vmem:[#allocation2 + $0x20] sm:$0xe]
        %v1058 = vld [vmem:[#allocation2 + $0x24] sm:$0x1]
        %v1059 = vld [vmem:[#allocation2 + $0x28] sm:$0xe]
        %v1060 = vld [vmem:[#allocation2 + $0x2c] sm:$0x1]
        %v1061 = vld [vmem:[#allocation2 + $0x30] sm:$0xe]
        %v1062 = vld [vmem:[#allocation2 + $0x34] sm:$0x1]
        %v1063 = vld [vmem:[#allocation2 + $0x38] sm:$0xe]
        %v1064 = vld [vmem:[#allocation2 + $0x3c] sm:$0x1]
        %vm1081 = vcmask 1042432
        %vm1082 = vcmask 1046532
        %vm1083 = vmor %vm1081, %vm1082
        %v1084 = vrot.slane %v1049, 5
        %v1085 = vrot.slane %v1084, 4
        %v1086 = vrot.slane %v1050, 5
        %v1087 = vsel %vm1083, %v1085, %v1086
        %v1088 = vrot.slane %v1051, 5
        %v1089 = vrot.slane %v1088, 4
        %v1090 = vrot.slane %v1052, 5
        %v1091 = vsel %vm1083, %v1089, %v1090
        %v1092 = vrot.slane %v1053, 5
        %v1093 = vrot.slane %v1092, 4
        %v1094 = vrot.slane %v1054, 5
        %v1095 = vsel %vm1083, %v1093, %v1094
        %v1096 = vrot.slane %v1055, 5
        %v1097 = vrot.slane %v1096, 4
        %v1098 = vrot.slane %v1056, 5
        %v1099 = vsel %vm1083, %v1097, %v1098
        %v1100 = vrot.slane %v1057, 5
        %v1101 = vrot.slane %v1100, 4
        %v1102 = vrot.slane %v1058, 5
        %v1103 = vsel %vm1083, %v1101, %v1102
        %v1104 = vrot.slane %v1059, 5
        %v1105 = vrot.slane %v1104, 4
        %v1106 = vrot.slane %v1060, 5
        %v1107 = vsel %vm1083, %v1105, %v1106
        %v1108 = vrot.slane %v1061, 5
        %v1109 = vrot.slane %v1108, 4
        %v1110 = vrot.slane %v1062, 5
        %v1111 = vsel %vm1083, %v1109, %v1110
        %v1112 = vrot.slane %v1063, 5
        %v1113 = vrot.slane %v1112, 4
        %v1114 = vrot.slane %v1064, 5
        %v1115 = vsel %vm1083, %v1113, %v1114
        %v1116 = vunpack.c.l.b16 %v1087
        %v1117 = vunpack.c.l.b16 %v1091
        %v1118 = vunpack.c.l.b16 %v1095
        %v1119 = vunpack.c.l.b16 %v1099
        %v1120 = vunpack.c.l.b16 %v1103
        %v1121 = vunpack.c.l.b16 %v1107
        %v1122 = vunpack.c.l.b16 %v1111
        %v1123 = vunpack.c.l.b16 %v1115
        %v1124 = vpack.c.b16 %v1117, %v1116
        %v1125 = vpack.c.b16 %v1119, %v1118
        %v1126 = vpack.c.b16 %v1121, %v1120
        %v1127 = vpack.c.b16 %v1123, %v1122
        %1128 = vrot.lane.b32.xlu0 %v1124, 16
        %v1129 = vpop.permute.xlu0 %1128
        %1130 = vrot.lane.b32.xlu0 %v1125, 16
        %v1131 = vpop.permute.xlu0 %1130
        %1132 = vrot.lane.b32.xlu0 %v1126, 16
        %v1133 = vpop.permute.xlu0 %1132
        %1134 = vrot.lane.b32.xlu0 %v1127, 16
        %v1135 = vpop.permute.xlu0 %1134
        %vm1140 = vcmask 195712
        %1141 = vst.msk [vmem:[#allocation3] sm:$0xff] %vm1140, %v1129
        %1142 = vst.msk [vmem:[#allocation3 + $0x8] sm:$0xff] %vm1140, %v1131
        %1143 = vst.msk [vmem:[#allocation3 + $0x10] sm:$0xff] %vm1140, %v1133
        %1144 = vst.msk [vmem:[#allocation3 + $0x18] sm:$0xff] %vm1140, %v1135
        %v1145 = vld [vmem:[%s660] sm:$0xf]
        %v1146 = vld [vmem:[%s660 + $0x8] sm:$0xf]
        %v1147 = vld [vmem:[%s660 + $0x10] sm:$0xf]
        %v1148 = vld [vmem:[%s660 + $0x18] sm:$0xf]
        %v1149 = vld [vmem:[%s660 + $0x20] sm:$0xf]
        %v1150 = vld [vmem:[%s660 + $0x28] sm:$0xf]
        %v1151 = vld [vmem:[%s660 + $0x30] sm:$0xf]
        %v1152 = vld [vmem:[%s660 + $0x38] sm:$0xf]
        %v1161 = vunpack.c.l.b16 %v1145
        %v1162 = vunpack.c.l.b16 %v1146
        %v1163 = vunpack.c.l.b16 %v1147
        %v1164 = vunpack.c.l.b16 %v1148
        %v1165 = vunpack.c.l.b16 %v1149
        %v1166 = vunpack.c.l.b16 %v1150
        %v1167 = vunpack.c.l.b16 %v1151
        %v1168 = vunpack.c.l.b16 %v1152
        %v1169 = vpack.c.b16 %v1162, %v1161
        %v1170 = vpack.c.b16 %v1164, %v1163
        %v1171 = vpack.c.b16 %v1166, %v1165
        %v1172 = vpack.c.b16 %v1168, %v1167
        %1173 = vrot.lane.b32.xlu0 %v1169, 24
        %v1174 = vpop.permute.xlu0 %1173
        %1175 = vrot.lane.b32.xlu0 %v1170, 24
        %v1176 = vpop.permute.xlu0 %1175
        %1177 = vrot.lane.b32.xlu0 %v1171, 24
        %v1178 = vpop.permute.xlu0 %1177
        %1179 = vrot.lane.b32.xlu0 %v1172, 24
        %v1180 = vpop.permute.xlu0 %1179
        %vm1185 = vcmask 261312
        %1186 = vst.msk [vmem:[#allocation3] sm:$0xff] %vm1185, %v1174
        %1187 = vst.msk [vmem:[#allocation3 + $0x8] sm:$0xff] %vm1185, %v1176
        %1188 = vst.msk [vmem:[#allocation3 + $0x10] sm:$0xff] %vm1185, %v1178
        %1189 = vst.msk [vmem:[#allocation3 + $0x18] sm:$0xff] %vm1185, %v1180
        %v1190 = vld [vmem:[%s660] sm:$0xf]
        %v1191 = vld [vmem:[%s660 + $0x4] sm:$0x1]
        %v1192 = vld [vmem:[%s660 + $0x8] sm:$0xf]
        %v1193 = vld [vmem:[%s660 + $0xc] sm:$0x1]
        %v1194 = vld [vmem:[%s660 + $0x10] sm:$0xf]
        %v1195 = vld [vmem:[%s660 + $0x14] sm:$0x1]
        %v1196 = vld [vmem:[%s660 + $0x18] sm:$0xf]
        %v1197 = vld [vmem:[%s660 + $0x1c] sm:$0x1]
        %v1198 = vld [vmem:[%s660 + $0x20] sm:$0xf]
        %v1199 = vld [vmem:[%s660 + $0x24] sm:$0x1]
        %v1200 = vld [vmem:[%s660 + $0x28] sm:$0xf]
        %v1201 = vld [vmem:[%s660 + $0x2c] sm:$0x1]
        %v1202 = vld [vmem:[%s660 + $0x30] sm:$0xf]
        %v1203 = vld [vmem:[%s660 + $0x34] sm:$0x1]
        %v1204 = vld [vmem:[%s660 + $0x38] sm:$0xf]
        %v1205 = vld [vmem:[%s660 + $0x3c] sm:$0x1]
        %v1207 = vshrl.u32 %v1190, 16
        %v1209 = vrot.slane %v1207, 4
        %v1210 = vshll.u32 %v1190, 16
        %v1212 = vrot.slane %v1210, 5
        %v1213 = vor.u32 %v1209, %v1212
        %v1214 = vrot.slane %v1213, 4
        %v1216 = vshll.u32 %v1191, 16
        %v1218 = vrot.slane %v1216, 5
        %v1219 = vsel %vm907, %v1214, %v1218
        %v1221 = vshrl.u32 %v1192, 16
        %v1223 = vrot.slane %v1221, 4
        %v1224 = vshll.u32 %v1192, 16
        %v1226 = vrot.slane %v1224, 5
        %v1227 = vor.u32 %v1223, %v1226
        %v1228 = vrot.slane %v1227, 4
        %v1230 = vshll.u32 %v1193, 16
        %v1232 = vrot.slane %v1230, 5
        %v1233 = vsel %vm907, %v1228, %v1232
        %v1235 = vshrl.u32 %v1194, 16
        %v1237 = vrot.slane %v1235, 4
        %v1238 = vshll.u32 %v1194, 16
        %v1240 = vrot.slane %v1238, 5
        %v1241 = vor.u32 %v1237, %v1240
        %v1242 = vrot.slane %v1241, 4
        %v1244 = vshll.u32 %v1195, 16
        %v1246 = vrot.slane %v1244, 5
        %v1247 = vsel %vm907, %v1242, %v1246
        %v1249 = vshrl.u32 %v1196, 16
        %v1251 = vrot.slane %v1249, 4
        %v1252 = vshll.u32 %v1196, 16
        %v1254 = vrot.slane %v1252, 5
        %v1255 = vor.u32 %v1251, %v1254
        %v1256 = vrot.slane %v1255, 4
        %v1258 = vshll.u32 %v1197, 16
        %v1260 = vrot.slane %v1258, 5
        %v1261 = vsel %vm907, %v1256, %v1260
        %v1263 = vshrl.u32 %v1198, 16
        %v1265 = vrot.slane %v1263, 4
        %v1266 = vshll.u32 %v1198, 16
        %v1268 = vrot.slane %v1266, 5
        %v1269 = vor.u32 %v1265, %v1268
        %v1270 = vrot.slane %v1269, 4
        %v1272 = vshll.u32 %v1199, 16
        %v1274 = vrot.slane %v1272, 5
        %v1275 = vsel %vm907, %v1270, %v1274
        %v1277 = vshrl.u32 %v1200, 16
        %v1279 = vrot.slane %v1277, 4
        %v1280 = vshll.u32 %v1200, 16
        %v1282 = vrot.slane %v1280, 5
        %v1283 = vor.u32 %v1279, %v1282
        %v1284 = vrot.slane %v1283, 4
        %v1286 = vshll.u32 %v1201, 16
        %v1288 = vrot.slane %v1286, 5
        %v1289 = vsel %vm907, %v1284, %v1288
        %v1291 = vshrl.u32 %v1202, 16
        %v1293 = vrot.slane %v1291, 4
        %v1294 = vshll.u32 %v1202, 16
        %v1296 = vrot.slane %v1294, 5
        %v1297 = vor.u32 %v1293, %v1296
        %v1298 = vrot.slane %v1297, 4
        %v1300 = vshll.u32 %v1203, 16
        %v1302 = vrot.slane %v1300, 5
        %v1303 = vsel %vm907, %v1298, %v1302
        %v1305 = vshrl.u32 %v1204, 16
        %v1307 = vrot.slane %v1305, 4
        %v1308 = vshll.u32 %v1204, 16
        %v1310 = vrot.slane %v1308, 5
        %v1311 = vor.u32 %v1307, %v1310
        %v1312 = vrot.slane %v1311, 4
        %v1314 = vshll.u32 %v1205, 16
        %v1316 = vrot.slane %v1314, 5
        %v1317 = vsel %vm907, %v1312, %v1316
        %v1318 = vunpack.c.l.b16 %v1219
        %v1319 = vunpack.c.l.b16 %v1233
        %v1320 = vunpack.c.l.b16 %v1247
        %v1321 = vunpack.c.l.b16 %v1261
        %v1322 = vunpack.c.l.b16 %v1275
        %v1323 = vunpack.c.l.b16 %v1289
        %v1324 = vunpack.c.l.b16 %v1303
        %v1325 = vunpack.c.l.b16 %v1317
        %v1326 = vpack.c.b16 %v1319, %v1318
        %v1327 = vpack.c.b16 %v1321, %v1320
        %v1328 = vpack.c.b16 %v1323, %v1322
        %v1329 = vpack.c.b16 %v1325, %v1324
        %1330 = vrot.lane.b32.xlu0 %v1326, 32
        %v1331 = vpop.permute.xlu0 %1330
        %1332 = vrot.lane.b32.xlu0 %v1327, 32
        %v1333 = vpop.permute.xlu0 %1332
        %1334 = vrot.lane.b32.xlu0 %v1328, 32
        %v1335 = vpop.permute.xlu0 %1334
        %1336 = vrot.lane.b32.xlu0 %v1329, 32
        %v1337 = vpop.permute.xlu0 %1336
        %vm1342 = vcmask 326912
        %1343 = vst.msk [vmem:[#allocation3] sm:$0xff] %vm1342, %v1331
        %1344 = vst.msk [vmem:[#allocation3 + $0x8] sm:$0xff] %vm1342, %v1333
        %1345 = vst.msk [vmem:[#allocation3 + $0x10] sm:$0xff] %vm1342, %v1335
        %1346 = vst.msk [vmem:[#allocation3 + $0x18] sm:$0xff] %vm1342, %v1337
        %v1347 = vld [vmem:[%s660] sm:$0xe]
        %v1348 = vld [vmem:[%s660 + $0x4] sm:$0x1]
        %v1349 = vld [vmem:[%s660 + $0x8] sm:$0xe]
        %v1350 = vld [vmem:[%s660 + $0xc] sm:$0x1]
        %v1351 = vld [vmem:[%s660 + $0x10] sm:$0xe]
        %v1352 = vld [vmem:[%s660 + $0x14] sm:$0x1]
        %v1353 = vld [vmem:[%s660 + $0x18] sm:$0xe]
        %v1354 = vld [vmem:[%s660 + $0x1c] sm:$0x1]
        %v1355 = vld [vmem:[%s660 + $0x20] sm:$0xe]
        %v1356 = vld [vmem:[%s660 + $0x24] sm:$0x1]
        %v1357 = vld [vmem:[%s660 + $0x28] sm:$0xe]
        %v1358 = vld [vmem:[%s660 + $0x2c] sm:$0x1]
        %v1359 = vld [vmem:[%s660 + $0x30] sm:$0xe]
        %v1360 = vld [vmem:[%s660 + $0x34] sm:$0x1]
        %v1361 = vld [vmem:[%s660 + $0x38] sm:$0xe]
        %v1362 = vld [vmem:[%s660 + $0x3c] sm:$0x1]
        %v1379 = vrot.slane %v1347, 5
        %v1380 = vrot.slane %v1379, 4
        %v1381 = vrot.slane %v1348, 5
        %v1382 = vsel %vm1083, %v1380, %v1381
        %v1383 = vrot.slane %v1349, 5
        %v1384 = vrot.slane %v1383, 4
        %v1385 = vrot.slane %v1350, 5
        %v1386 = vsel %vm1083, %v1384, %v1385
        %v1387 = vrot.slane %v1351, 5
        %v1388 = vrot.slane %v1387, 4
        %v1389 = vrot.slane %v1352, 5
        %v1390 = vsel %vm1083, %v1388, %v1389
        %v1391 = vrot.slane %v1353, 5
        %v1392 = vrot.slane %v1391, 4
        %v1393 = vrot.slane %v1354, 5
        %v1394 = vsel %vm1083, %v1392, %v1393
        %v1395 = vrot.slane %v1355, 5
        %v1396 = vrot.slane %v1395, 4
        %v1397 = vrot.slane %v1356, 5
        %v1398 = vsel %vm1083, %v1396, %v1397
        %v1399 = vrot.slane %v1357, 5
        %v1400 = vrot.slane %v1399, 4
        %v1401 = vrot.slane %v1358, 5
        %v1402 = vsel %vm1083, %v1400, %v1401
        %v1403 = vrot.slane %v1359, 5
        %v1404 = vrot.slane %v1403, 4
        %v1405 = vrot.slane %v1360, 5
        %v1406 = vsel %vm1083, %v1404, %v1405
        %v1407 = vrot.slane %v1361, 5
        %v1408 = vrot.slane %v1407, 4
        %v1409 = vrot.slane %v1362, 5
        %v1410 = vsel %vm1083, %v1408, %v1409
        %v1411 = vunpack.c.l.b16 %v1382
        %v1412 = vunpack.c.l.b16 %v1386
        %v1413 = vunpack.c.l.b16 %v1390
        %v1414 = vunpack.c.l.b16 %v1394
        %v1415 = vunpack.c.l.b16 %v1398
        %v1416 = vunpack.c.l.b16 %v1402
        %v1417 = vunpack.c.l.b16 %v1406
        %v1418 = vunpack.c.l.b16 %v1410
        %v1419 = vpack.c.b16 %v1412, %v1411
        %v1420 = vpack.c.b16 %v1414, %v1413
        %v1421 = vpack.c.b16 %v1416, %v1415
        %v1422 = vpack.c.b16 %v1418, %v1417
        %1423 = vrot.lane.b32.xlu0 %v1419, 40
        %v1424 = vpop.permute.xlu0 %1423
        %1425 = vrot.lane.b32.xlu0 %v1420, 40
        %v1426 = vpop.permute.xlu0 %1425
        %1427 = vrot.lane.b32.xlu0 %v1421, 40
        %v1428 = vpop.permute.xlu0 %1427
        %1429 = vrot.lane.b32.xlu0 %v1422, 40
        %v1430 = vpop.permute.xlu0 %1429
        %vm1435 = vcmask 392512
        %1436 = vst.msk [vmem:[#allocation3] sm:$0xff] %vm1435, %v1424
        %1437 = vst.msk [vmem:[#allocation3 + $0x8] sm:$0xff] %vm1435, %v1426
        %1438 = vst.msk [vmem:[#allocation3 + $0x10] sm:$0xff] %vm1435, %v1428
        %1439 = vst.msk [vmem:[#allocation3 + $0x18] sm:$0xff] %vm1435, %v1430
        %s1440 = scalar_lea.vmem [#allocation2], 16
        %v1441 = vld [vmem:[%s1440] sm:$0xf]
        %v1442 = vld [vmem:[%s1440 + $0x8] sm:$0xf]
        %v1443 = vld [vmem:[%s1440 + $0x10] sm:$0xf]
        %v1444 = vld [vmem:[%s1440 + $0x18] sm:$0xf]
        %v1445 = vld [vmem:[%s1440 + $0x20] sm:$0xf]
        %v1446 = vld [vmem:[%s1440 + $0x28] sm:$0xf]
        %v1447 = vld [vmem:[%s1440 + $0x30] sm:$0xf]
        %v1448 = vld [vmem:[%s1440 + $0x38] sm:$0xf]
        %v1457 = vunpack.c.l.b16 %v1441
        %v1458 = vunpack.c.l.b16 %v1442
        %v1459 = vunpack.c.l.b16 %v1443
        %v1460 = vunpack.c.l.b16 %v1444
        %v1461 = vunpack.c.l.b16 %v1445
        %v1462 = vunpack.c.l.b16 %v1446
        %v1463 = vunpack.c.l.b16 %v1447
        %v1464 = vunpack.c.l.b16 %v1448
        %v1465 = vpack.c.b16 %v1458, %v1457
        %v1466 = vpack.c.b16 %v1460, %v1459
        %v1467 = vpack.c.b16 %v1462, %v1461
        %v1468 = vpack.c.b16 %v1464, %v1463
        %1469 = vrot.lane.b32.xlu0 %v1465, 48
        %v1470 = vpop.permute.xlu0 %1469
        %1471 = vrot.lane.b32.xlu0 %v1466, 48
        %v1472 = vpop.permute.xlu0 %1471
        %1473 = vrot.lane.b32.xlu0 %v1467, 48
        %v1474 = vpop.permute.xlu0 %1473
        %1475 = vrot.lane.b32.xlu0 %v1468, 48
        %v1476 = vpop.permute.xlu0 %1475
        %vm1481 = vcmask 458112
        %1482 = vst.msk [vmem:[#allocation3] sm:$0xff] %vm1481, %v1470
        %1483 = vst.msk [vmem:[#allocation3 + $0x8] sm:$0xff] %vm1481, %v1472
        %1484 = vst.msk [vmem:[#allocation3 + $0x10] sm:$0xff] %vm1481, %v1474
        %1485 = vst.msk [vmem:[#allocation3 + $0x18] sm:$0xff] %vm1481, %v1476
        %v1486 = vld [vmem:[%s1440] sm:$0xf]
        %v1487 = vld [vmem:[%s1440 + $0x4] sm:$0x1]
        %v1488 = vld [vmem:[%s1440 + $0x8] sm:$0xf]
        %v1489 = vld [vmem:[%s1440 + $0xc] sm:$0x1]
        %v1490 = vld [vmem:[%s1440 + $0x10] sm:$0xf]
        %v1491 = vld [vmem:[%s1440 + $0x14] sm:$0x1]
        %v1492 = vld [vmem:[%s1440 + $0x18] sm:$0xf]
        %v1493 = vld [vmem:[%s1440 + $0x1c] sm:$0x1]
        %v1494 = vld [vmem:[%s1440 + $0x20] sm:$0xf]
        %v1495 = vld [vmem:[%s1440 + $0x24] sm:$0x1]
        %v1496 = vld [vmem:[%s1440 + $0x28] sm:$0xf]
        %v1497 = vld [vmem:[%s1440 + $0x2c] sm:$0x1]
        %v1498 = vld [vmem:[%s1440 + $0x30] sm:$0xf]
        %v1499 = vld [vmem:[%s1440 + $0x34] sm:$0x1]
        %v1500 = vld [vmem:[%s1440 + $0x38] sm:$0xf]
        %v1501 = vld [vmem:[%s1440 + $0x3c] sm:$0x1]
        %v1503 = vshrl.u32 %v1486, 16
        %v1505 = vrot.slane %v1503, 4
        %v1506 = vshll.u32 %v1486, 16
        %v1508 = vrot.slane %v1506, 5
        %v1509 = vor.u32 %v1505, %v1508
        %v1510 = vrot.slane %v1509, 4
        %v1512 = vshll.u32 %v1487, 16
        %v1514 = vrot.slane %v1512, 5
        %v1515 = vsel %vm907, %v1510, %v1514
        %v1517 = vshrl.u32 %v1488, 16
        %v1519 = vrot.slane %v1517, 4
        %v1520 = vshll.u32 %v1488, 16
        %v1522 = vrot.slane %v1520, 5
        %v1523 = vor.u32 %v1519, %v1522
        %v1524 = vrot.slane %v1523, 4
        %v1526 = vshll.u32 %v1489, 16
        %v1528 = vrot.slane %v1526, 5
        %v1529 = vsel %vm907, %v1524, %v1528
        %v1531 = vshrl.u32 %v1490, 16
        %v1533 = vrot.slane %v1531, 4
        %v1534 = vshll.u32 %v1490, 16
        %v1536 = vrot.slane %v1534, 5
        %v1537 = vor.u32 %v1533, %v1536
        %v1538 = vrot.slane %v1537, 4
        %v1540 = vshll.u32 %v1491, 16
        %v1542 = vrot.slane %v1540, 5
        %v1543 = vsel %vm907, %v1538, %v1542
        %v1545 = vshrl.u32 %v1492, 16
        %v1547 = vrot.slane %v1545, 4
        %v1548 = vshll.u32 %v1492, 16
        %v1550 = vrot.slane %v1548, 5
        %v1551 = vor.u32 %v1547, %v1550
        %v1552 = vrot.slane %v1551, 4
        %v1554 = vshll.u32 %v1493, 16
        %v1556 = vrot.slane %v1554, 5
        %v1557 = vsel %vm907, %v1552, %v1556
        %v1559 = vshrl.u32 %v1494, 16
        %v1561 = vrot.slane %v1559, 4
        %v1562 = vshll.u32 %v1494, 16
        %v1564 = vrot.slane %v1562, 5
        %v1565 = vor.u32 %v1561, %v1564
        %v1566 = vrot.slane %v1565, 4
        %v1568 = vshll.u32 %v1495, 16
        %v1570 = vrot.slane %v1568, 5
        %v1571 = vsel %vm907, %v1566, %v1570
        %v1573 = vshrl.u32 %v1496, 16
        %v1575 = vrot.slane %v1573, 4
        %v1576 = vshll.u32 %v1496, 16
        %v1578 = vrot.slane %v1576, 5
        %v1579 = vor.u32 %v1575, %v1578
        %v1580 = vrot.slane %v1579, 4
        %v1582 = vshll.u32 %v1497, 16
        %v1584 = vrot.slane %v1582, 5
        %v1585 = vsel %vm907, %v1580, %v1584
        %v1587 = vshrl.u32 %v1498, 16
        %v1589 = vrot.slane %v1587, 4
        %v1590 = vshll.u32 %v1498, 16
        %v1592 = vrot.slane %v1590, 5
        %v1593 = vor.u32 %v1589, %v1592
        %v1594 = vrot.slane %v1593, 4
        %v1596 = vshll.u32 %v1499, 16
        %v1598 = vrot.slane %v1596, 5
        %v1599 = vsel %vm907, %v1594, %v1598
        %v1601 = vshrl.u32 %v1500, 16
        %v1603 = vrot.slane %v1601, 4
        %v1604 = vshll.u32 %v1500, 16
        %v1606 = vrot.slane %v1604, 5
        %v1607 = vor.u32 %v1603, %v1606
        %v1608 = vrot.slane %v1607, 4
        %v1610 = vshll.u32 %v1501, 16
        %v1612 = vrot.slane %v1610, 5
        %v1613 = vsel %vm907, %v1608, %v1612
        %v1614 = vunpack.c.l.b16 %v1515
        %v1615 = vunpack.c.l.b16 %v1529
        %v1616 = vunpack.c.l.b16 %v1543
        %v1617 = vunpack.c.l.b16 %v1557
        %v1618 = vunpack.c.l.b16 %v1571
        %v1619 = vunpack.c.l.b16 %v1585
        %v1620 = vunpack.c.l.b16 %v1599
        %v1621 = vunpack.c.l.b16 %v1613
        %v1622 = vpack.c.b16 %v1615, %v1614
        %v1623 = vpack.c.b16 %v1617, %v1616
        %v1624 = vpack.c.b16 %v1619, %v1618
        %v1625 = vpack.c.b16 %v1621, %v1620
        %1626 = vrot.lane.b32.xlu0 %v1622, 56
        %v1627 = vpop.permute.xlu0 %1626
        %1628 = vrot.lane.b32.xlu0 %v1623, 56
        %v1629 = vpop.permute.xlu0 %1628
        %1630 = vrot.lane.b32.xlu0 %v1624, 56
        %v1631 = vpop.permute.xlu0 %1630
        %1632 = vrot.lane.b32.xlu0 %v1625, 56
        %v1633 = vpop.permute.xlu0 %1632
        %vm1638 = vcmask 523712
        %1639 = vst.msk [vmem:[#allocation3] sm:$0xff] %vm1638, %v1627
        %1640 = vst.msk [vmem:[#allocation3 + $0x8] sm:$0xff] %vm1638, %v1629
        %1641 = vst.msk [vmem:[#allocation3 + $0x10] sm:$0xff] %vm1638, %v1631
        %1642 = vst.msk [vmem:[#allocation3 + $0x18] sm:$0xff] %vm1638, %v1633
        %v1643 = vld [vmem:[%s1440] sm:$0xe]
        %v1644 = vld [vmem:[%s1440 + $0x4] sm:$0x1]
        %v1645 = vld [vmem:[%s1440 + $0x8] sm:$0xe]
        %v1646 = vld [vmem:[%s1440 + $0xc] sm:$0x1]
        %v1647 = vld [vmem:[%s1440 + $0x10] sm:$0xe]
        %v1648 = vld [vmem:[%s1440 + $0x14] sm:$0x1]
        %v1649 = vld [vmem:[%s1440 + $0x18] sm:$0xe]
        %v1650 = vld [vmem:[%s1440 + $0x1c] sm:$0x1]
        %v1651 = vld [vmem:[%s1440 + $0x20] sm:$0xe]
        %v1652 = vld [vmem:[%s1440 + $0x24] sm:$0x1]
        %v1653 = vld [vmem:[%s1440 + $0x28] sm:$0xe]
        %v1654 = vld [vmem:[%s1440 + $0x2c] sm:$0x1]
        %v1655 = vld [vmem:[%s1440 + $0x30] sm:$0xe]
        %v1656 = vld [vmem:[%s1440 + $0x34] sm:$0x1]
        %v1657 = vld [vmem:[%s1440 + $0x38] sm:$0xe]
        %v1658 = vld [vmem:[%s1440 + $0x3c] sm:$0x1]
        %v1675 = vrot.slane %v1643, 5
        %v1676 = vrot.slane %v1675, 4
        %v1677 = vrot.slane %v1644, 5
        %v1678 = vsel %vm1083, %v1676, %v1677
        %v1679 = vrot.slane %v1645, 5
        %v1680 = vrot.slane %v1679, 4
        %v1681 = vrot.slane %v1646, 5
        %v1682 = vsel %vm1083, %v1680, %v1681
        %v1683 = vrot.slane %v1647, 5
        %v1684 = vrot.slane %v1683, 4
        %v1685 = vrot.slane %v1648, 5
        %v1686 = vsel %vm1083, %v1684, %v1685
        %v1687 = vrot.slane %v1649, 5
        %v1688 = vrot.slane %v1687, 4
        %v1689 = vrot.slane %v1650, 5
        %v1690 = vsel %vm1083, %v1688, %v1689
        %v1691 = vrot.slane %v1651, 5
        %v1692 = vrot.slane %v1691, 4
        %v1693 = vrot.slane %v1652, 5
        %v1694 = vsel %vm1083, %v1692, %v1693
        %v1695 = vrot.slane %v1653, 5
        %v1696 = vrot.slane %v1695, 4
        %v1697 = vrot.slane %v1654, 5
        %v1698 = vsel %vm1083, %v1696, %v1697
        %v1699 = vrot.slane %v1655, 5
        %v1700 = vrot.slane %v1699, 4
        %v1701 = vrot.slane %v1656, 5
        %v1702 = vsel %vm1083, %v1700, %v1701
        %v1703 = vrot.slane %v1657, 5
        %v1704 = vrot.slane %v1703, 4
        %v1705 = vrot.slane %v1658, 5
        %v1706 = vsel %vm1083, %v1704, %v1705
        %v1707 = vunpack.c.l.b16 %v1678
        %v1708 = vunpack.c.l.b16 %v1682
        %v1709 = vunpack.c.l.b16 %v1686
        %v1710 = vunpack.c.l.b16 %v1690
        %v1711 = vunpack.c.l.b16 %v1694
        %v1712 = vunpack.c.l.b16 %v1698
        %v1713 = vunpack.c.l.b16 %v1702
        %v1714 = vunpack.c.l.b16 %v1706
        %v1715 = vpack.c.b16 %v1708, %v1707
        %v1716 = vpack.c.b16 %v1710, %v1709
        %v1717 = vpack.c.b16 %v1712, %v1711
        %v1718 = vpack.c.b16 %v1714, %v1713
        %1719 = vrot.lane.b32.xlu0 %v1715, 64
        %v1720 = vpop.permute.xlu0 %1719
        %1721 = vrot.lane.b32.xlu0 %v1716, 64
        %v1722 = vpop.permute.xlu0 %1721
        %1723 = vrot.lane.b32.xlu0 %v1717, 64
        %v1724 = vpop.permute.xlu0 %1723
        %1725 = vrot.lane.b32.xlu0 %v1718, 64
        %v1726 = vpop.permute.xlu0 %1725
        %vm1731 = vcmask 589312
        %1732 = vst.msk [vmem:[#allocation3] sm:$0xff] %vm1731, %v1720
        %1733 = vst.msk [vmem:[#allocation3 + $0x8] sm:$0xff] %vm1731, %v1722
        %1734 = vst.msk [vmem:[#allocation3 + $0x10] sm:$0xff] %vm1731, %v1724
        %1735 = vst.msk [vmem:[#allocation3 + $0x18] sm:$0xff] %vm1731, %v1726
        %v1736 = vld [vmem:[#allocation3] sm:$0xff]
        %v1737 = vld [vmem:[#allocation3 + $0x8] sm:$0xff]
        %v1738 = vld [vmem:[#allocation3 + $0x10] sm:$0xff]
        %v1739 = vld [vmem:[#allocation3 + $0x18] sm:$0xff]
        %v1740 = vld [vmem:[%s3] sm:$0xf]
        %v1741 = vld [vmem:[%s3 + $0x4] sm:$0xf]
        %v1742 = vld [vmem:[%s3 + $0x8] sm:$0xf]
        %v1743 = vld [vmem:[%s3 + $0xc] sm:$0xf]
        %v1744 = vld [vmem:[%s3 + $0x10] sm:$0xf]
        %v1745 = vld [vmem:[%s3 + $0x14] sm:$0xf]
        %v1746 = vld [vmem:[%s3 + $0x18] sm:$0xf]
        %v1747 = vld [vmem:[%s3 + $0x1c] sm:$0xf]
        %v1748 = vld [vmem:[%s3 + $0x20] sm:$0xf]
        %v1749 = vld [vmem:[%s4] sm:$0x1]
        %v1751 = vlaneseq
        %v1752 = vshrl.u32 %v1751, 7
        %v1753 = vsub.s32 0, %v1752
        %v1754 = vrot.slane %v1749, %v1753
        %v1765 = vunpack.c.l.b16 %v1740
        %v1766 = vunpack.c.l.b16 %v1741
        %v1767 = vunpack.c.l.b16 %v1742
        %v1768 = vunpack.c.l.b16 %v1743
        %v1769 = vunpack.c.l.b16 %v1744
        %v1770 = vunpack.c.l.b16 %v1745
        %v1771 = vunpack.c.l.b16 %v1746
        %v1772 = vunpack.c.l.b16 %v1747
        %v1773 = vunpack.c.l.b16 %v1748
        %v1774 = vpack.c.b16 %v1766, %v1765
        %v1775 = vpack.c.b16 %v1768, %v1767
        %v1776 = vpack.c.b16 %v1770, %v1769
        %v1777 = vpack.c.b16 %v1772, %v1771
        %v1778 = vpack.c.b16 %v1773, %v1773
        %vm1783 = vcmask 588800
        %v1785 = vsel %vm1783, %v1736, 0
        %v1788 = vsel %vm1783, %v1737, 0
        %v1791 = vsel %vm1783, %v1738, 0
        %v1794 = vsel %vm1783, %v1739, 0
        %v1797 = vsel %vm479, %v1778, 0
        %1799 = vmatprep.subr.bf16.mxu0 0
        %1800 = vmatpush1.bf16.msra.mxu0 %v1774
        %1801 = vmatprep.subr.bf16.mxu0 0
        %1802 = vmatpush1.bf16.msra.mxu0 %v1775
        %1803 = vmatprep.subr.bf16.mxu0 0
        %1804 = vmatpush1.bf16.msra.mxu0 %v1776
        %1805 = vmatprep.subr.bf16.mxu0 0
        %1806 = vmatpush1.bf16.msra.mxu0 %v1777
        %1807 = vmatprep.subr.bf16.mxu0 0
        %1808 = vmatpush1.bf16.msra.mxu0 %v1797
        %1809 = vmatprep.subr.bf16.mxu0 0
        %1810 = vmatpush1.bf16.msra.mxu0 0
        %1811 = vmatprep.subr.bf16.mxu0 0
        %1812 = vmatpush1.bf16.msra.mxu0 0
        %1813 = vmatprep.subr.bf16.mxu0 0
        %1814 = vmatpush1.bf16.msra.mxu0 0
        %1815 = vmatprep.subr.bf16.mxu0 0
        %1816 = vmatpush1.bf16.msra.mxu0 0
        %1817 = vmatprep.subr.bf16.mxu0 0
        %1818 = vmatpush1.bf16.msra.mxu0 0
        %1819 = vmatprep.subr.bf16.mxu0 0
        %1820 = vmatpush1.bf16.msra.mxu0 0
        %1821 = vmatprep.subr.bf16.mxu0 0
        %1822 = vmatpush1.bf16.msra.mxu0 0
        %1823 = vmatprep.subr.bf16.mxu0 0
        %1824 = vmatpush1.bf16.msra.mxu0 0
        %1825 = vmatprep.subr.bf16.mxu0 0
        %1826 = vmatpush1.bf16.msra.mxu0 0
        %1827 = vmatprep.subr.bf16.mxu0 0
        %1828 = vmatpush1.bf16.msra.mxu0 0
        %1829 = vmatprep.subr.bf16.mxu0 0
        %1830 = vmatpush1.bf16.msra.mxu0 0
        %1831 = vmatprep.mubr.bf16.mxu0 0
        %1832 = vmatmul.mubr.bf16.gmra.mrb[0].mxu0 %v1785
        %v1833 = vpop.f32.mrb[0].mxu0
        %v1834 = vadd.f32 %v1754, %v1833
        %v1835 = vpop.f32.mrb[0].mxu0
        %v1836 = vpop.f32.mrb[0].mxu0
        %v1837 = vadd.f32 %v1754, %v1836
        %v1838 = vpop.f32.mrb[0].mxu0
        %1839 = vmatprep.mubr.bf16.mxu0 0
        %1840 = vmatmul.mubr.bf16.gmra.mrb[0].mxu0 %v1788
        %v1841 = vpop.f32.mrb[0].mxu0
        %v1842 = vadd.f32 %v1754, %v1841
        %v1843 = vpop.f32.mrb[0].mxu0
        %v1844 = vpop.f32.mrb[0].mxu0
        %v1845 = vadd.f32 %v1754, %v1844
        %v1846 = vpop.f32.mrb[0].mxu0
        %1847 = vmatprep.mubr.bf16.mxu0 0
        %1848 = vmatmul.mubr.bf16.gmra.mrb[0].mxu0 %v1791
        %v1849 = vpop.f32.mrb[0].mxu0
        %v1850 = vadd.f32 %v1754, %v1849
        %v1851 = vpop.f32.mrb[0].mxu0
        %v1852 = vpop.f32.mrb[0].mxu0
        %v1853 = vadd.f32 %v1754, %v1852
        %v1854 = vpop.f32.mrb[0].mxu0
        %1855 = vmatprep.mubr.bf16.mxu0 0
        %1856 = vmatmul.mubr.bf16.gmra.mrb[0].mxu0 %v1794
        %v1857 = vpop.f32.mrb[0].mxu0
        %v1858 = vadd.f32 %v1754, %v1857
        %v1859 = vpop.f32.mrb[0].mxu0
        %v1860 = vpop.f32.mrb[0].mxu0
        %v1861 = vadd.f32 %v1754, %v1860
        %v1862 = vpop.f32.mrb[0].mxu0
        %1863 = vdwg.mxu0
        %v1864 = vmax.f32 %v1834, 0.0
        %v1865 = vmax.f32 %v1837, 0.0
        %v1866 = vmax.f32 %v1842, 0.0
        %v1867 = vmax.f32 %v1845, 0.0
        %v1868 = vmax.f32 %v1850, 0.0
        %v1869 = vmax.f32 %v1853, 0.0
        %v1870 = vmax.f32 %v1858, 0.0
        %v1871 = vmax.f32 %v1861, 0.0
        %v1872 = vpack.c.bf16 %v1865, %v1864
        %v1873 = vpack.c.bf16 %v1867, %v1866
        %v1874 = vpack.c.bf16 %v1869, %v1868
        %v1875 = vpack.c.bf16 %v1871, %v1870
        %v1876 = vld [vmem:[%s5] sm:$0xf]
        %v1877 = vld [vmem:[%s6] sm:$0x1]
        %v1879 = vlaneseq
        %v1880 = vshrl.u32 %v1879, 7
        %v1881 = vsub.s32 0, %v1880
        %v1882 = vrot.slane %v1877, %v1881
        %v1885 = vsel %vm466, %v1872, 0
        %v1888 = vsel %vm466, %v1873, 0
        %v1891 = vsel %vm466, %v1874, 0
        %v1894 = vsel %vm466, %v1875, 0
        %v1897 = vsel %vm479, %v1876, 0
        %1899 = vmatprep.subr.bf16.mxu0 0
        %1900 = vmatpush1.bf16.msra.mxu0 %v1897
        %1901 = vmatprep.subr.bf16.mxu0 0
        %1902 = vmatpush1.bf16.msra.mxu0 0
        %1903 = vmatprep.subr.bf16.mxu0 0
        %1904 = vmatpush1.bf16.msra.mxu0 0
        %1905 = vmatprep.subr.bf16.mxu0 0
        %1906 = vmatpush1.bf16.msra.mxu0 0
        %1907 = vmatprep.subr.bf16.mxu0 0
        %1908 = vmatpush1.bf16.msra.mxu0 0
        %1909 = vmatprep.subr.bf16.mxu0 0
        %1910 = vmatpush1.bf16.msra.mxu0 0
        %1911 = vmatprep.subr.bf16.mxu0 0
        %1912 = vmatpush1.bf16.msra.mxu0 0
        %1913 = vmatprep.subr.bf16.mxu0 0
        %1914 = vmatpush1.bf16.msra.mxu0 0
        %1915 = vmatprep.subr.bf16.mxu0 0
        %1916 = vmatpush1.bf16.msra.mxu0 0
        %1917 = vmatprep.subr.bf16.mxu0 0
        %1918 = vmatpush1.bf16.msra.mxu0 0
        %1919 = vmatprep.subr.bf16.mxu0 0
        %1920 = vmatpush1.bf16.msra.mxu0 0
        %1921 = vmatprep.subr.bf16.mxu0 0
        %1922 = vmatpush1.bf16.msra.mxu0 0
        %1923 = vmatprep.subr.bf16.mxu0 0
        %1924 = vmatpush1.bf16.msra.mxu0 0
        %1925 = vmatprep.subr.bf16.mxu0 0
        %1926 = vmatpush1.bf16.msra.mxu0 0
        %1927 = vmatprep.subr.bf16.mxu0 0
        %1928 = vmatpush1.bf16.msra.mxu0 0
        %1929 = vmatprep.subr.bf16.mxu0 0
        %1930 = vmatpush1.bf16.msra.mxu0 0
        %1931 = vmatprep.mubr.bf16.mxu0 0
        %1932 = vmatmul.mubr.bf16.gmra.mrb[0].mxu0 %v1885
        %v1933 = vpop.f32.mrb[0].mxu0
        %v1934 = vadd.f32 %v1882, %v1933
        %v1935 = vpop.f32.mrb[0].mxu0
        %v1936 = vpop.f32.mrb[0].mxu0
        %v1937 = vadd.f32 %v1882, %v1936
        %v1938 = vpop.f32.mrb[0].mxu0
        %1939 = vmatprep.mubr.bf16.mxu0 0
        %1940 = vmatmul.mubr.bf16.gmra.mrb[0].mxu0 %v1888
        %v1941 = vpop.f32.mrb[0].mxu0
        %v1942 = vadd.f32 %v1882, %v1941
        %v1943 = vpop.f32.mrb[0].mxu0
        %v1944 = vpop.f32.mrb[0].mxu0
        %v1945 = vadd.f32 %v1882, %v1944
        %v1946 = vpop.f32.mrb[0].mxu0
        %1947 = vmatprep.mubr.bf16.mxu0 0
        %1948 = vmatmul.mubr.bf16.gmra.mrb[0].mxu0 %v1891
        %v1949 = vpop.f32.mrb[0].mxu0
        %v1950 = vadd.f32 %v1882, %v1949
        %v1951 = vpop.f32.mrb[0].mxu0
        %v1952 = vpop.f32.mrb[0].mxu0
        %v1953 = vadd.f32 %v1882, %v1952
        %v1954 = vpop.f32.mrb[0].mxu0
        %1955 = vmatprep.mubr.bf16.mxu0 0
        %1956 = vmatmul.mubr.bf16.gmra.mrb[0].mxu0 %v1894
        %v1957 = vpop.f32.mrb[0].mxu0
        %v1958 = vadd.f32 %v1882, %v1957
        %v1959 = vpop.f32.mrb[0].mxu0
        %v1960 = vpop.f32.mrb[0].mxu0
        %v1961 = vadd.f32 %v1882, %v1960
        %v1962 = vpop.f32.mrb[0].mxu0
        %1963 = vdwg.mxu0
        %v1964 = vld [vmem:[%s7] sm:$0xf]
        %v1965 = vld [vmem:[%s8] sm:$0x1]
        %v1967 = vlaneseq
        %v1968 = vshrl.u32 %v1967, 7
        %v1969 = vsub.s32 0, %v1968
        %v1970 = vrot.slane %v1965, %v1969
        %v1973 = vsel %vm479, %v1964, 0
        %1975 = vmatprep.subr.bf16.mxu0 0
        %1976 = vmatpush1.bf16.msra.mxu0 %v1973
        %1977 = vmatprep.subr.bf16.mxu0 0
        %1978 = vmatpush1.bf16.msra.mxu0 0
        %1979 = vmatprep.subr.bf16.mxu0 0
        %1980 = vmatpush1.bf16.msra.mxu0 0
        %1981 = vmatprep.subr.bf16.mxu0 0
        %1982 = vmatpush1.bf16.msra.mxu0 0
        %1983 = vmatprep.subr.bf16.mxu0 0
        %1984 = vmatpush1.bf16.msra.mxu0 0
        %1985 = vmatprep.subr.bf16.mxu0 0
        %1986 = vmatpush1.bf16.msra.mxu0 0
        %1987 = vmatprep.subr.bf16.mxu0 0
        %1988 = vmatpush1.bf16.msra.mxu0 0
        %1989 = vmatprep.subr.bf16.mxu0 0
        %1990 = vmatpush1.bf16.msra.mxu0 0
        %1991 = vmatprep.subr.bf16.mxu0 0
        %1992 = vmatpush1.bf16.msra.mxu0 0
        %1993 = vmatprep.subr.bf16.mxu0 0
        %1994 = vmatpush1.bf16.msra.mxu0 0
        %1995 = vmatprep.subr.bf16.mxu0 0
        %1996 = vmatpush1.bf16.msra.mxu0 0
        %1997 = vmatprep.subr.bf16.mxu0 0
        %1998 = vmatpush1.bf16.msra.mxu0 0
        %1999 = vmatprep.subr.bf16.mxu0 0
        %2000 = vmatpush1.bf16.msra.mxu0 0
        %2001 = vmatprep.subr.bf16.mxu0 0
        %2002 = vmatpush1.bf16.msra.mxu0 0
        %2003 = vmatprep.subr.bf16.mxu0 0
        %2004 = vmatpush1.bf16.msra.mxu0 0
        %2005 = vmatprep.subr.bf16.mxu0 0
        %2006 = vmatpush1.bf16.msra.mxu0 0
        %2007 = vmatprep.mubr.bf16.mxu0 0
        %2008 = vmatmul.mubr.bf16.gmra.mrb[0].mxu0 %v468
        %v2009 = vpop.f32.mrb[0].mxu0
        %v2010 = vadd.f32 %v1970, %v2009
        %v2011 = vpop.f32.mrb[0].mxu0
        %v2012 = vpop.f32.mrb[0].mxu0
        %v2013 = vadd.f32 %v1970, %v2012
        %v2014 = vpop.f32.mrb[0].mxu0
        %2015 = vmatprep.mubr.bf16.mxu0 0
        %2016 = vmatmul.mubr.bf16.gmra.mrb[0].mxu0 %v471
        %v2017 = vpop.f32.mrb[0].mxu0
        %v2018 = vadd.f32 %v1970, %v2017
        %v2019 = vpop.f32.mrb[0].mxu0
        %v2020 = vpop.f32.mrb[0].mxu0
        %v2021 = vadd.f32 %v1970, %v2020
        %v2022 = vpop.f32.mrb[0].mxu0
        %2023 = vmatprep.mubr.bf16.mxu0 0
        %2024 = vmatmul.mubr.bf16.gmra.mrb[0].mxu0 %v474
        %v2025 = vpop.f32.mrb[0].mxu0
        %v2026 = vadd.f32 %v1970, %v2025
        %v2027 = vpop.f32.mrb[0].mxu0
        %v2028 = vpop.f32.mrb[0].mxu0
        %v2029 = vadd.f32 %v1970, %v2028
        %v2030 = vpop.f32.mrb[0].mxu0
        %2031 = vmatprep.mubr.bf16.mxu0 0
        %2032 = vmatmul.mubr.bf16.gmra.mrb[0].mxu0 %v477
        %v2033 = vpop.f32.mrb[0].mxu0
        %v2034 = vadd.f32 %v1970, %v2033
        %v2035 = vpop.f32.mrb[0].mxu0
        %v2036 = vpop.f32.mrb[0].mxu0
        %v2037 = vadd.f32 %v1970, %v2036
        %v2038 = vpop.f32.mrb[0].mxu0
        %2039 = vdwg.mxu0
        %v2040 = vadd.f32 %v1934, %v2010
        %v2041 = vadd.f32 %v1937, %v2013
        %v2042 = vadd.f32 %v1942, %v2018
        %v2043 = vadd.f32 %v1945, %v2021
        %v2044 = vadd.f32 %v1950, %v2026
        %v2045 = vadd.f32 %v1953, %v2029
        %v2046 = vadd.f32 %v1958, %v2034
        %v2047 = vadd.f32 %v1961, %v2037
        %v2048 = vmax.f32 %v2040, 0.0
        %v2049 = vmax.f32 %v2041, 0.0
        %v2050 = vmax.f32 %v2042, 0.0
        %v2051 = vmax.f32 %v2043, 0.0
        %v2052 = vmax.f32 %v2044, 0.0
        %v2053 = vmax.f32 %v2045, 0.0
        %v2054 = vmax.f32 %v2046, 0.0
        %v2055 = vmax.f32 %v2047, 0.0
        %vm2056 = vcmask 261120
        %2057 = vst.msk [vmem:[%s339] sm:$0xff] %vm2056, %v2048
        %2058 = vst.msk [vmem:[%s339 + $0x8] sm:$0xff] %vm2056, %v2049
        %2059 = vst.msk [vmem:[%s339 + $0x10] sm:$0xff] %vm2056, %v2050
        %2060 = vst.msk [vmem:[%s339 + $0x18] sm:$0xff] %vm2056, %v2051
        %2061 = vst.msk [vmem:[%s339 + $0x20] sm:$0xff] %vm2056, %v2052
        %2062 = vst.msk [vmem:[%s339 + $0x28] sm:$0xff] %vm2056, %v2053
        %2063 = vst.msk [vmem:[%s339 + $0x30] sm:$0xff] %vm2056, %v2054
        %2064 = vst.msk [vmem:[%s339 + $0x38] sm:$0xff] %vm2056, %v2055
        %s2065 = sand.u32 %s239, 1
        %s2066 = scalar_lea.sflag [#allocation5], %s2065
        %s2067 = sand.u32 %s239, 1
        %s2068 = smul.addr %s2067, 64
        %s2069 = scalar_lea.vmem [#allocation4], %s2068
        // Predicated region
        $region65: #{_lambda_.1} parent=55 // pred_check
          %p2070 = pneg %p249
        $region66: #{_lambda_.1} parent=55 // pred_check_branch
          %2072 = sbr.rel (%p2070) target = $region68
        $region67: #{_lambda_.1} parent=55 // pred_region
          %s2073 = smul.u32 8, %s28
          %s2075 = ssub.s32 1024, 1024
          %2076 = vsyncadd %s2066, %s2075
          %s2077 = smul.addr %s27, 8
          %s2078 = sadd.s32 %s2073, %s2077
          %s2079 = smul.addr %s2078, 128
          %s2080 = scalar_lea.hbm %s9, %s2079
          %s2081 = sshll.u32 %s2069, 4
          %s2082 = int_to_ptr.vmem [resolvable:$true] %s2081
          %2087 = dma.vmem_to_hbm [thread:$0]  %s2082, 1024, %s2080, %s2066, 128, 128, 8
        $region68: #{_lambda_.1} parent=55 // pred_fallthru
          _
      $region56: #{_lambda_.1} parent=5 // pred_fallthru
        _
      %p2088 = scmp.le.s32.totalorder 2, %s18
      // Predicated region
      $region69: #{_lambda_.1} parent=5 // pred_check
        %p2089 = pneg %p2088
      $region70: #{_lambda_.1} parent=5 // pred_check_branch
        %2091 = sbr.rel (%p2089) target = $region72
      $region71: #{_lambda_.1} parent=5 // pred_region
        %s2092 = ssub.s32 %s18, 2
        // Predicated region
        $region73: #{_lambda_.1} parent=71 // pred_check
          %p2093 = pneg %p255
        $region74: #{_lambda_.1} parent=71 // pred_check_branch
          %2095 = sbr.rel (%p2093) target = $region76
        $region75: #{_lambda_.1} parent=71 // pred_region
          %s2096 = sand.u32 %s240, 1
          %s2097 = scalar_lea.sflag [#allocation5], %s2096
          %s2098 = sand.u32 %s240, 1
          %s2099 = smul.addr %s2098, 64
          %s2100 = scalar_lea.vmem [#allocation4], %s2099
          %2101 = dma.done %s2097, 1024
        $region76: #{_lambda_.1} parent=71 // pred_fallthru
          _
      $region72: #{_lambda_.1} parent=5 // pred_fallthru
        _
    $region6: #{_lambda_.1} parent=1 // loop_footer
      %s22 = sadd.s32 1, %s18
    $region7: #{_lambda_.1} parent=1 // loop_footer_branch
      %17 = sbr.rel target = $region3
    $region8: #{_lambda_.1} parent=1 // loop_exit
      _
    %2102 = vsyncpa [#allocation5], 1
    %s2103 = scalar_lea.sflag [#allocation5], 1
    %2104 = vsyncpa %s2103, 1

</llo_original>
